<compile_context>
chip_gen: v7x
topology: tpu7x:2x2x1
jax: 0.10.0
libtpu: 0.0.40
codegen_flags: <defaults>
</compile_context>

<pallas_src>
import functools

import jax
import jax.numpy as jnp
from jax.experimental import pallas as pl
from jax.experimental.pallas import tpu as pltpu

D_MODEL = 32
N_HEAD = 4
HEAD_DIM = D_MODEL // N_HEAD
SEQ = 8
BATCH = 2
LN_EPS = 1e-5

# ---- packed parameter slab layout: (SLAB_ROWS, 128) f32, fully lane-dense ---
# rows 0..31   : lanes 0..95  = in_proj_weight.T (D, 3D)
#                lanes 96..127 = out_proj.weight.T (D, D)
# rows 32..63  : lanes 0..127 = c_fc.weight.T (D, 4D)
# rows 64..95  : c_proj.weight.T (4D, D) stored as 4 lane-adjacent (D, D) blocks
#                (block k at lanes k*D .. (k+1)*D-1 holds rows k*D..(k+1)*D-1)
# rows 96..103 : 8 packed 1-D params (one vreg)
ROW_WQKV = 0
COL_WOUT = 3 * D_MODEL
ROW_FCW = ROW_WQKV + D_MODEL
ROW_PJW = ROW_FCW + D_MODEL
ROW_VEC = ROW_PJW + D_MODEL
(VEC_LN1W, VEC_LN1B, VEC_LN2W, VEC_LN2B,
 VEC_BQKV, VEC_BOUT, VEC_FCB, VEC_PJB) = range(8)
SLAB_ROWS = ROW_VEC + 8            # 104 (multiple of 8)
SLAB_COLS = 128


def _layernorm(v, w, b):
    mu = jnp.mean(v, axis=-1, keepdims=True)
    var = jnp.mean((v - mu) ** 2, axis=-1, keepdims=True)
    return (v - mu) * jax.lax.rsqrt(var + LN_EPS) * w + b


def block_kernel(x_ref, p_ref, o_ref, *, n_batch):
    D, H, hd = D_MODEL, N_HEAD, HEAD_DIM
    x = x_ref[...].astype(jnp.float32)                     # (T, D), T = L * N
    T = x.shape[0]

    # ---- unpack densified parameter slab (static, aligned row slices) ----
    w_row0 = p_ref[ROW_WQKV:ROW_WQKV + D, :]               # (D, 128) full-lane load
    w_qkv = w_row0[:, 0:3 * D]                             # (D, 3D)  = in_proj_weight.T
    w_out = w_row0[:, COL_WOUT:COL_WOUT + D]               # (D, D)   = out_proj.weight.T
    fc_w = p_ref[ROW_FCW:ROW_FCW + D, :]                   # (D, 4D)  = c_fc.weight.T
    pj_blk = p_ref[ROW_PJW:ROW_PJW + D, :]                 # (D, 128) 4 packed (D,D) blocks
    vecs = p_ref[ROW_VEC:ROW_VEC + 8, :]                   # (8, 128) — one vreg
    ln1_w = vecs[VEC_LN1W:VEC_LN1W + 1, 0:D]
    ln1_b = vecs[VEC_LN1B:VEC_LN1B + 1, 0:D]
    ln2_w = vecs[VEC_LN2W:VEC_LN2W + 1, 0:D]
    ln2_b = vecs[VEC_LN2B:VEC_LN2B + 1, 0:D]
    b_qkv = vecs[VEC_BQKV:VEC_BQKV + 1, 0:3 * D]
    b_out = vecs[VEC_BOUT:VEC_BOUT + 1, 0:D]
    fc_b = vecs[VEC_FCB:VEC_FCB + 1, 0:4 * D]
    pj_b = vecs[VEC_PJB:VEC_PJB + 1, 0:D]

    # ---- attention branch: x + MHA(LN1(x)) ----
    h = _layernorm(x, ln1_w, ln1_b)                        # (T, D)
    qkv = jnp.dot(h, w_qkv, preferred_element_type=jnp.float32) + b_qkv   # (T, 3D)
    q = qkv[:, 0:D] * (float(hd) ** -0.5)
    k = qkv[:, D:2 * D]
    v = qkv[:, 2 * D:3 * D]

    # Additive mask blocking attention across batch elements.  NOTE: this mask
    # is tied to the (L, N, D) -> (L*N, D) reshape in the wrapper: flattened
    # row i belongs to batch (i % n_batch).  Every row has >= L unmasked
    # (same-batch) entries, so the softmax never sees a fully-masked row.
    rb = jax.lax.broadcasted_iota(jnp.int32, (T, T), 0) % n_batch
    cb = jax.lax.broadcasted_iota(jnp.int32, (T, T), 1) % n_batch
    neg = jnp.where(rb == cb, 0.0, -1e30).astype(jnp.float32)

    dn_nt = (((1,), (1,)), ((), ()))                       # contract last dims (A @ B^T)
    attn_proj = jnp.zeros((T, D), jnp.float32)
    for hh in range(H):                                    # static unroll over 4 heads
        sl = slice(hh * hd, (hh + 1) * hd)
        s = jax.lax.dot_general(q[:, sl], k[:, sl], dn_nt,
                                preferred_element_type=jnp.float32) + neg  # (T, T)
        s = s - jnp.max(s, axis=-1, keepdims=True)
        e = jnp.exp(s)
        p = e / jnp.sum(e, axis=-1, keepdims=True)         # exact division (correctness)
        head = jnp.dot(p, v[:, sl], preferred_element_type=jnp.float32)    # (T, hd)
        # Project this head straight through its slice of out_proj and
        # accumulate — no lane-axis concatenation of 8-lane fragments.
        attn_proj = attn_proj + jnp.dot(head, w_out[sl, :],
                                        preferred_element_type=jnp.float32)
    x = x + attn_proj + b_out

    # ---- MLP branch: x + c_proj(QuickGELU(c_fc(LN2(x)))) ----
    h2 = _layernorm(x, ln2_w, ln2_b)
    fc = jnp.dot(h2, fc_w, preferred_element_type=jnp.float32) + fc_b      # (T, 4D)
    fc = fc * jax.nn.sigmoid(1.702 * fc)                   # QuickGELU
    mlp = jnp.zeros((T, D), jnp.float32)
    for kb in range(4):                                    # 4 accumulated (T,32)@(32,32)
        csl = slice(kb * D, (kb + 1) * D)
        mlp = mlp + jnp.dot(fc[:, csl], pj_blk[:, csl],
                            preferred_element_type=jnp.float32)
    o_ref[...] = (x + mlp + pj_b).astype(o_ref.dtype)


@jax.jit
def residual_attention_block(x_lnd, param_slab):
    """x_lnd: (L, N, D) exactly like the PyTorch module (seq, batch, d_model)."""
    L, N, D = x_lnd.shape
    # Free, contiguous reshape (no transpose).  Row i of x_flat is (l = i // N,
    # n = i % N); the in-kernel batch-blocking mask depends on this ordering.
    x_flat = x_lnd.reshape(L * N, D)
    out = pl.pallas_call(
        functools.partial(block_kernel, n_batch=N),
        out_shape=jax.ShapeDtypeStruct((L * N, D), x_lnd.dtype),
        grid=(1,),                                         # single invocation
        in_specs=[pl.BlockSpec((L * N, D), lambda i: (0, 0)),
                  pl.BlockSpec((SLAB_ROWS, SLAB_COLS), lambda i: (0, 0))],
        out_specs=pl.BlockSpec((L * N, D), lambda i: (0, 0)),
        compiler_params=pltpu.CompilerParams(dimension_semantics=("arbitrary",)),
    )(x_flat, param_slab)
    return out.reshape(L, N, D)


def make_params(key):
    """Deterministic synthetic weights with nn.MultiheadAttention / nn.Linear shapes,
    plus a single packed, pre-transposed, lane-dense parameter slab for the kernel."""
    ks = jax.random.split(key, 12)
    D = D_MODEL
    raw = {
        "in_w": jax.random.normal(ks[0], (3 * D, D), jnp.float32) * 0.05,
        "in_b": jax.random.normal(ks[1], (3 * D,), jnp.float32) * 0.02,
        "out_w": jax.random.normal(ks[2], (D, D), jnp.float32) * 0.05,
        "out_b": jax.random.normal(ks[3], (D,), jnp.float32) * 0.02,
        "ln1_w": 1.0 + 0.1 * jax.random.normal(ks[4], (D,), jnp.float32),
        "ln1_b": 0.05 * jax.random.normal(ks[5], (D,), jnp.float32),
        "ln2_w": 1.0 + 0.1 * jax.random.normal(ks[6], (D,), jnp.float32),
        "ln2_b": 0.05 * jax.random.normal(ks[7], (D,), jnp.float32),
        "fc_w": jax.random.normal(ks[8], (4 * D, D), jnp.float32) * 0.05,
        "fc_b": jax.random.normal(ks[9], (4 * D,), jnp.float32) * 0.02,
        "pj_w": jax.random.normal(ks[10], (D, 4 * D), jnp.float32) * 0.05,
        "pj_b": jax.random.normal(ks[11], (D,), jnp.float32) * 0.02,
    }
    slab = jnp.zeros((SLAB_ROWS, SLAB_COLS), jnp.float32)
    slab = slab.at[ROW_WQKV:ROW_WQKV + D, 0:3 * D].set(raw["in_w"].T)
    slab = slab.at[ROW_WQKV:ROW_WQKV + D, COL_WOUT:COL_WOUT + D].set(raw["out_w"].T)
    slab = slab.at[ROW_FCW:ROW_FCW + D, 0:4 * D].set(raw["fc_w"].T)
    pj_t = raw["pj_w"].T                                   # (4D, D)
    for kb in range(4):
        slab = slab.at[ROW_PJW:ROW_PJW + D, kb * D:(kb + 1) * D].set(
            pj_t[kb * D:(kb + 1) * D, :])
    slab = slab.at[ROW_VEC + VEC_LN1W, 0:D].set(raw["ln1_w"])
    slab = slab.at[ROW_VEC + VEC_LN1B, 0:D].set(raw["ln1_b"])
    slab = slab.at[ROW_VEC + VEC_LN2W, 0:D].set(raw["ln2_w"])
    slab = slab.at[ROW_VEC + VEC_LN2B, 0:D].set(raw["ln2_b"])
    slab = slab.at[ROW_VEC + VEC_BQKV, 0:3 * D].set(raw["in_b"])
    slab = slab.at[ROW_VEC + VEC_BOUT, 0:D].set(raw["out_b"])
    slab = slab.at[ROW_VEC + VEC_FCB, 0:4 * D].set(raw["fc_b"])
    slab = slab.at[ROW_VEC + VEC_PJB, 0:D].set(raw["pj_b"])
    return raw, slab


def reference(x, raw):
    """Pure-JAX mirror of the PyTorch forward (x: (L, N, D))."""
    def ln(v, w, b):
        mu = v.mean(-1, keepdims=True)
        var = ((v - mu) ** 2).mean(-1, keepdims=True)
        return (v - mu) / jnp.sqrt(var + LN_EPS) * w + b

    L, N, D = x.shape
    h = ln(x, raw["ln1_w"], raw["ln1_b"])
    qkv = h @ raw["in_w"].T + raw["in_b"]
    q, k, v = jnp.split(qkv, 3, axis=-1)

    def heads(t):  # (L, N, D) -> (N, H, L, hd)
        return t.reshape(L, N, N_HEAD, HEAD_DIM).transpose(1, 2, 0, 3)

    qh, kh, vh = heads(q), heads(k), heads(v)
    s = jnp.einsum("nhld,nhmd->nhlm", qh, kh) * (HEAD_DIM ** -0.5)
    p = jax.nn.softmax(s, axis=-1)
    o = jnp.einsum("nhlm,nhmd->nhld", p, vh).transpose(2, 0, 1, 3).reshape(L, N, D)
    x = x + o @ raw["out_w"].T + raw["out_b"]

    h2 = ln(x, raw["ln2_w"], raw["ln2_b"])
    fc = h2 @ raw["fc_w"].T + raw["fc_b"]
    fc = fc * jax.nn.sigmoid(1.702 * fc)
    return x + fc @ raw["pj_w"].T + raw["pj_b"]


if __name__ == "__main__":
    key = jax.random.PRNGKey(0)
    kx, kp = jax.random.split(key)
    x = jax.random.normal(kx, (SEQ, BATCH, D_MODEL), jnp.float32)   # (L, N, D)
    raw, param_slab = make_params(kp)

    out = residual_attention_block(x, param_slab)
    out = jax.block_until_ready(out)

    ref = reference(x, raw)
    assert out.shape == ref.shape == (SEQ, BATCH, D_MODEL)
    # f32 forward with MXU matmuls + transcendental differences between the
    # Pallas and XLA paths; 5e-4 absolute is a tight bound at these magnitudes.
    assert jnp.allclose(out, ref, atol=5e-4, rtol=1e-4), (
        f"max abs err {jnp.max(jnp.abs(out - ref))}")
    print("KERNEL_OK")
</pallas_src>

<mosaic_0001>
module attributes {stable_mosaic.version = 11 : i64} {
  func.func @block_kernel(%arg0: i32, %arg1: memref<16x32xf32, #tpu.memory_space<vmem>>, %arg2: memref<104x128xf32, #tpu.memory_space<vmem>>, %arg3: memref<16x32xf32, #tpu.memory_space<vmem>>) attributes {dimension_semantics = [#tpu.dimension_semantics<arbitrary>], iteration_bounds = array<i64: 1>, scalar_prefetch = 0 : i64, scratch_operands = 0 : i64, tpu.core_type = #tpu.core_type<tc>, window_params = [{pipeline_mode = #tpu.pipeline_mode<synchronous>, transform_indices = @transform_0, window_bounds = array<i64: 16, 32>}, {pipeline_mode = #tpu.pipeline_mode<synchronous>, transform_indices = @transform_1, window_bounds = array<i64: 104, 128>}, {pipeline_mode = #tpu.pipeline_mode<synchronous>, transform_indices = @transform_2, window_bounds = array<i64: 16, 32>}]} {
    %c0 = arith.constant 0 : index
    %c0_0 = arith.constant 0 : index
    %0 = vector.load %arg1[%c0, %c0_0] : memref<16x32xf32, #tpu.memory_space<vmem>>, vector<16x32xf32>
    %c0_1 = arith.constant 0 : index
    %c0_2 = arith.constant 0 : index
    %1 = vector.load %arg2[%c0_1, %c0_2] : memref<104x128xf32, #tpu.memory_space<vmem>>, vector<32x128xf32>
    %2 = vector.extract_strided_slice %1 {offsets = [0, 0], sizes = [32, 96], strides = [1, 1]} : vector<32x128xf32> to vector<32x96xf32>
    %3 = vector.extract_strided_slice %1 {offsets = [0, 96], sizes = [32, 32], strides = [1, 1]} : vector<32x128xf32> to vector<32x32xf32>
    %c32 = arith.constant 32 : index
    %c0_3 = arith.constant 0 : index
    %4 = vector.load %arg2[%c32, %c0_3] : memref<104x128xf32, #tpu.memory_space<vmem>>, vector<32x128xf32>
    %c64 = arith.constant 64 : index
    %c0_4 = arith.constant 0 : index
    %5 = vector.load %arg2[%c64, %c0_4] : memref<104x128xf32, #tpu.memory_space<vmem>>, vector<32x128xf32>
    %c96 = arith.constant 96 : index
    %c0_5 = arith.constant 0 : index
    %6 = vector.load %arg2[%c96, %c0_5] : memref<104x128xf32, #tpu.memory_space<vmem>>, vector<8x128xf32>
    %7 = vector.extract_strided_slice %6 {offsets = [0, 0], sizes = [1, 32], strides = [1, 1]} : vector<8x128xf32> to vector<1x32xf32>
    %8 = vector.extract_strided_slice %6 {offsets = [1, 0], sizes = [1, 32], strides = [1, 1]} : vector<8x128xf32> to vector<1x32xf32>
    %9 = vector.extract_strided_slice %6 {offsets = [2, 0], sizes = [1, 32], strides = [1, 1]} : vector<8x128xf32> to vector<1x32xf32>
    %10 = vector.extract_strided_slice %6 {offsets = [3, 0], sizes = [1, 32], strides = [1, 1]} : vector<8x128xf32> to vector<1x32xf32>
    %11 = vector.extract_strided_slice %6 {offsets = [4, 0], sizes = [1, 96], strides = [1, 1]} : vector<8x128xf32> to vector<1x96xf32>
    %12 = vector.extract_strided_slice %6 {offsets = [5, 0], sizes = [1, 32], strides = [1, 1]} : vector<8x128xf32> to vector<1x32xf32>
    %13 = vector.extract_strided_slice %6 {offsets = [6, 0], sizes = [1, 128], strides = [1, 1]} : vector<8x128xf32> to vector<1x128xf32>
    %14 = vector.extract_strided_slice %6 {offsets = [7, 0], sizes = [1, 32], strides = [1, 1]} : vector<8x128xf32> to vector<1x32xf32>
    %cst = arith.constant dense<0.000000e+00> : vector<16xf32>
    %15 = vector.multi_reduction <add>, %0, %cst [1] : vector<16x32xf32> to vector<16xf32>
    %16 = vector.shape_cast %15 : vector<16xf32> to vector<16x1xf32>
    %cst_6 = arith.constant 3.200000e+01 : f32
    %17 = vector.broadcast %cst_6 : f32 to vector<16x1xf32>
    %18 = arith.divf %16, %17 : vector<16x1xf32>
    %19 = vector.broadcast %18 : vector<16x1xf32> to vector<16x32xf32>
    %20 = arith.subf %0, %19 : vector<16x32xf32>
    %21 = arith.mulf %20, %20 : vector<16x32xf32>
    %cst_7 = arith.constant dense<0.000000e+00> : vector<16xf32>
    %22 = vector.multi_reduction <add>, %21, %cst_7 [1] : vector<16x32xf32> to vector<16xf32>
    %23 = vector.shape_cast %22 : vector<16xf32> to vector<16x1xf32>
    %cst_8 = arith.constant 3.200000e+01 : f32
    %24 = vector.broadcast %cst_8 : f32 to vector<16x1xf32>
    %25 = arith.divf %23, %24 : vector<16x1xf32>
    %26 = vector.broadcast %18 : vector<16x1xf32> to vector<16x32xf32>
    %27 = arith.subf %0, %26 : vector<16x32xf32>
    %cst_9 = arith.constant 9.99999974E-6 : f32
    %28 = vector.broadcast %cst_9 : f32 to vector<16x1xf32>
    %29 = arith.addf %25, %28 : vector<16x1xf32>
    %30 = math.rsqrt %29 : vector<16x1xf32>
    %31 = vector.broadcast %30 : vector<16x1xf32> to vector<16x32xf32>
    %32 = arith.mulf %27, %31 : vector<16x32xf32>
    %33 = vector.broadcast %7 : vector<1x32xf32> to vector<16x32xf32>
    %34 = arith.mulf %32, %33 : vector<16x32xf32>
    %35 = vector.broadcast %8 : vector<1x32xf32> to vector<16x32xf32>
    %36 = arith.addf %34, %35 : vector<16x32xf32>
    %cst_10 = arith.constant dense<0.000000e+00> : vector<16x96xf32>
    %37 = tpu.matmul %36, %2, %cst_10 {dimension_numbers = #tpu.dot_dimension_numbers<[1], [0], [0], [1], [0, 0, 1, 1], [], []>} : vector<16x32xf32>, vector<32x96xf32>, vector<16x96xf32> -> vector<16x96xf32>
    %38 = vector.broadcast %11 : vector<1x96xf32> to vector<16x96xf32>
    %39 = arith.addf %37, %38 : vector<16x96xf32>
    %40 = vector.extract_strided_slice %39 {offsets = [0, 0], sizes = [16, 32], strides = [1, 1]} : vector<16x96xf32> to vector<16x32xf32>
    %cst_11 = arith.constant 0.353553385 : f32
    %41 = vector.broadcast %cst_11 : f32 to vector<16x32xf32>
    %42 = arith.mulf %40, %41 : vector<16x32xf32>
    %43 = vector.extract_strided_slice %39 {offsets = [0, 32], sizes = [16, 32], strides = [1, 1]} : vector<16x96xf32> to vector<16x32xf32>
    %44 = vector.extract_strided_slice %39 {offsets = [0, 64], sizes = [16, 32], strides = [1, 1]} : vector<16x96xf32> to vector<16x32xf32>
    %45 = tpu.iota {dimensions = array<i32: 0>} : vector<16x16xi32>
    %c2_i32 = arith.constant 2 : i32
    %c0_i32 = arith.constant 0 : i32
    %46 = arith.cmpi eq, %c2_i32, %c0_i32 : i32
    %c1_i32 = arith.constant 1 : i32
    %47 = arith.select %46, %c1_i32, %c2_i32 : i32
    %48 = vector.broadcast %47 : i32 to vector<16x16xi32>
    %49 = arith.remsi %45, %48 : vector<16x16xi32>
    %c0_i32_12 = arith.constant 0 : i32
    %50 = vector.broadcast %c0_i32_12 : i32 to vector<16x16xi32>
    %51 = arith.cmpi ne, %49, %50 : vector<16x16xi32>
    %c0_i32_13 = arith.constant 0 : i32
    %52 = vector.broadcast %c0_i32_13 : i32 to vector<16x16xi32>
    %53 = arith.cmpi slt, %49, %52 : vector<16x16xi32>
    %c0_i32_14 = arith.constant 0 : i32
    %54 = arith.cmpi slt, %47, %c0_i32_14 : i32
    %55 = vector.broadcast %54 : i1 to vector<16x16xi1>
    %56 = vector.broadcast %55 : vector<16x16xi1> to vector<16x16xi1>
    %57 = arith.xori %53, %56 : vector<16x16xi1>
    %58 = arith.andi %57, %51 : vector<16x16xi1>
    %59 = vector.broadcast %47 : i32 to vector<16x16xi32>
    %60 = arith.addi %49, %59 : vector<16x16xi32>
    %61 = arith.select %58, %60, %49 : vector<16x16xi1>, vector<16x16xi32>
    %62 = tpu.iota {dimensions = array<i32: 1>} : vector<16x16xi32>
    %c2_i32_15 = arith.constant 2 : i32
    %c0_i32_16 = arith.constant 0 : i32
    %63 = arith.cmpi eq, %c2_i32_15, %c0_i32_16 : i32
    %c1_i32_17 = arith.constant 1 : i32
    %64 = arith.select %63, %c1_i32_17, %c2_i32_15 : i32
    %65 = vector.broadcast %64 : i32 to vector<16x16xi32>
    %66 = arith.remsi %62, %65 : vector<16x16xi32>
    %c0_i32_18 = arith.constant 0 : i32
    %67 = vector.broadcast %c0_i32_18 : i32 to vector<16x16xi32>
    %68 = arith.cmpi ne, %66, %67 : vector<16x16xi32>
    %c0_i32_19 = arith.constant 0 : i32
    %69 = vector.broadcast %c0_i32_19 : i32 to vector<16x16xi32>
    %70 = arith.cmpi slt, %66, %69 : vector<16x16xi32>
    %c0_i32_20 = arith.constant 0 : i32
    %71 = arith.cmpi slt, %64, %c0_i32_20 : i32
    %72 = vector.broadcast %71 : i1 to vector<16x16xi1>
    %73 = vector.broadcast %72 : vector<16x16xi1> to vector<16x16xi1>
    %74 = arith.xori %70, %73 : vector<16x16xi1>
    %75 = arith.andi %74, %68 : vector<16x16xi1>
    %76 = vector.broadcast %64 : i32 to vector<16x16xi32>
    %77 = arith.addi %66, %76 : vector<16x16xi32>
    %78 = arith.select %75, %77, %66 : vector<16x16xi1>, vector<16x16xi32>
    %79 = arith.cmpi eq, %61, %78 : vector<16x16xi32>
    %cst_21 = arith.constant 0.000000e+00 : f32
    %cst_22 = arith.constant -1.000000e+30 : f32
    %80 = vector.broadcast %cst_21 : f32 to vector<16x16xf32>
    %81 = vector.broadcast %cst_22 : f32 to vector<16x16xf32>
    %82 = arith.select %79, %80, %81 : vector<16x16xi1>, vector<16x16xf32>
    %cst_23 = arith.constant 0.000000e+00 : f32
    %83 = vector.broadcast %cst_23 : f32 to vector<16x32xf32>
    %84 = vector.extract_strided_slice %42 {offsets = [0, 0], sizes = [16, 8], strides = [1, 1]} : vector<16x32xf32> to vector<16x8xf32>
    %85 = vector.extract_strided_slice %43 {offsets = [0, 0], sizes = [16, 8], strides = [1, 1]} : vector<16x32xf32> to vector<16x8xf32>
    %cst_24 = arith.constant dense<0.000000e+00> : vector<16x16xf32>
    %86 = tpu.matmul %84, %85, %cst_24 {dimension_numbers = #tpu.dot_dimension_numbers<[1], [1], [0], [0], [0, 0, 1, 0], [], []>} : vector<16x8xf32>, vector<16x8xf32>, vector<16x16xf32> -> vector<16x16xf32>
    %87 = arith.addf %86, %82 : vector<16x16xf32>
    %cst_25 = arith.constant dense<0xFF800000> : vector<16xf32>
    %88 = vector.multi_reduction <maximumf>, %87, %cst_25 [1] : vector<16x16xf32> to vector<16xf32>
    %89 = vector.shape_cast %88 : vector<16xf32> to vector<16x1xf32>
    %90 = vector.broadcast %89 : vector<16x1xf32> to vector<16x16xf32>
    %91 = arith.subf %87, %90 : vector<16x16xf32>
    %92 = math.exp %91 : vector<16x16xf32>
    %cst_26 = arith.constant dense<0.000000e+00> : vector<16xf32>
    %93 = vector.multi_reduction <add>, %92, %cst_26 [1] : vector<16x16xf32> to vector<16xf32>
    %94 = vector.shape_cast %93 : vector<16xf32> to vector<16x1xf32>
    %95 = vector.broadcast %94 : vector<16x1xf32> to vector<16x16xf32>
    %96 = arith.divf %92, %95 : vector<16x16xf32>
    %97 = vector.extract_strided_slice %44 {offsets = [0, 0], sizes = [16, 8], strides = [1, 1]} : vector<16x32xf32> to vector<16x8xf32>
    %cst_27 = arith.constant dense<0.000000e+00> : vector<16x8xf32>
    %98 = tpu.matmul %96, %97, %cst_27 {dimension_numbers = #tpu.dot_dimension_numbers<[1], [0], [0], [1], [0, 0, 1, 1], [], []>} : vector<16x16xf32>, vector<16x8xf32>, vector<16x8xf32> -> vector<16x8xf32>
    %99 = vector.extract_strided_slice %3 {offsets = [0, 0], sizes = [8, 32], strides = [1, 1]} : vector<32x32xf32> to vector<8x32xf32>
    %cst_28 = arith.constant dense<0.000000e+00> : vector<16x32xf32>
    %100 = tpu.matmul %98, %99, %cst_28 {dimension_numbers = #tpu.dot_dimension_numbers<[1], [0], [0], [1], [0, 0, 1, 1], [], []>} : vector<16x8xf32>, vector<8x32xf32>, vector<16x32xf32> -> vector<16x32xf32>
    %101 = arith.addf %83, %100 : vector<16x32xf32>
    %102 = vector.extract_strided_slice %42 {offsets = [0, 8], sizes = [16, 8], strides = [1, 1]} : vector<16x32xf32> to vector<16x8xf32>
    %103 = vector.extract_strided_slice %43 {offsets = [0, 8], sizes = [16, 8], strides = [1, 1]} : vector<16x32xf32> to vector<16x8xf32>
    %cst_29 = arith.constant dense<0.000000e+00> : vector<16x16xf32>
    %104 = tpu.matmul %102, %103, %cst_29 {dimension_numbers = #tpu.dot_dimension_numbers<[1], [1], [0], [0], [0, 0, 1, 0], [], []>} : vector<16x8xf32>, vector<16x8xf32>, vector<16x16xf32> -> vector<16x16xf32>
    %105 = arith.addf %104, %82 : vector<16x16xf32>
    %cst_30 = arith.constant dense<0xFF800000> : vector<16xf32>
    %106 = vector.multi_reduction <maximumf>, %105, %cst_30 [1] : vector<16x16xf32> to vector<16xf32>
    %107 = vector.shape_cast %106 : vector<16xf32> to vector<16x1xf32>
    %108 = vector.broadcast %107 : vector<16x1xf32> to vector<16x16xf32>
    %109 = arith.subf %105, %108 : vector<16x16xf32>
    %110 = math.exp %109 : vector<16x16xf32>
    %cst_31 = arith.constant dense<0.000000e+00> : vector<16xf32>
    %111 = vector.multi_reduction <add>, %110, %cst_31 [1] : vector<16x16xf32> to vector<16xf32>
    %112 = vector.shape_cast %111 : vector<16xf32> to vector<16x1xf32>
    %113 = vector.broadcast %112 : vector<16x1xf32> to vector<16x16xf32>
    %114 = arith.divf %110, %113 : vector<16x16xf32>
    %115 = vector.extract_strided_slice %44 {offsets = [0, 8], sizes = [16, 8], strides = [1, 1]} : vector<16x32xf32> to vector<16x8xf32>
    %cst_32 = arith.constant dense<0.000000e+00> : vector<16x8xf32>
    %116 = tpu.matmul %114, %115, %cst_32 {dimension_numbers = #tpu.dot_dimension_numbers<[1], [0], [0], [1], [0, 0, 1, 1], [], []>} : vector<16x16xf32>, vector<16x8xf32>, vector<16x8xf32> -> vector<16x8xf32>
    %117 = vector.extract_strided_slice %3 {offsets = [8, 0], sizes = [8, 32], strides = [1, 1]} : vector<32x32xf32> to vector<8x32xf32>
    %cst_33 = arith.constant dense<0.000000e+00> : vector<16x32xf32>
    %118 = tpu.matmul %116, %117, %cst_33 {dimension_numbers = #tpu.dot_dimension_numbers<[1], [0], [0], [1], [0, 0, 1, 1], [], []>} : vector<16x8xf32>, vector<8x32xf32>, vector<16x32xf32> -> vector<16x32xf32>
    %119 = arith.addf %101, %118 : vector<16x32xf32>
    %120 = vector.extract_strided_slice %42 {offsets = [0, 16], sizes = [16, 8], strides = [1, 1]} : vector<16x32xf32> to vector<16x8xf32>
    %121 = vector.extract_strided_slice %43 {offsets = [0, 16], sizes = [16, 8], strides = [1, 1]} : vector<16x32xf32> to vector<16x8xf32>
    %cst_34 = arith.constant dense<0.000000e+00> : vector<16x16xf32>
    %122 = tpu.matmul %120, %121, %cst_34 {dimension_numbers = #tpu.dot_dimension_numbers<[1], [1], [0], [0], [0, 0, 1, 0], [], []>} : vector<16x8xf32>, vector<16x8xf32>, vector<16x16xf32> -> vector<16x16xf32>
    %123 = arith.addf %122, %82 : vector<16x16xf32>
    %cst_35 = arith.constant dense<0xFF800000> : vector<16xf32>
    %124 = vector.multi_reduction <maximumf>, %123, %cst_35 [1] : vector<16x16xf32> to vector<16xf32>
    %125 = vector.shape_cast %124 : vector<16xf32> to vector<16x1xf32>
    %126 = vector.broadcast %125 : vector<16x1xf32> to vector<16x16xf32>
    %127 = arith.subf %123, %126 : vector<16x16xf32>
    %128 = math.exp %127 : vector<16x16xf32>
    %cst_36 = arith.constant dense<0.000000e+00> : vector<16xf32>
    %129 = vector.multi_reduction <add>, %128, %cst_36 [1] : vector<16x16xf32> to vector<16xf32>
    %130 = vector.shape_cast %129 : vector<16xf32> to vector<16x1xf32>
    %131 = vector.broadcast %130 : vector<16x1xf32> to vector<16x16xf32>
    %132 = arith.divf %128, %131 : vector<16x16xf32>
    %133 = vector.extract_strided_slice %44 {offsets = [0, 16], sizes = [16, 8], strides = [1, 1]} : vector<16x32xf32> to vector<16x8xf32>
    %cst_37 = arith.constant dense<0.000000e+00> : vector<16x8xf32>
    %134 = tpu.matmul %132, %133, %cst_37 {dimension_numbers = #tpu.dot_dimension_numbers<[1], [0], [0], [1], [0, 0, 1, 1], [], []>} : vector<16x16xf32>, vector<16x8xf32>, vector<16x8xf32> -> vector<16x8xf32>
    %135 = vector.extract_strided_slice %3 {offsets = [16, 0], sizes = [8, 32], strides = [1, 1]} : vector<32x32xf32> to vector<8x32xf32>
    %cst_38 = arith.constant dense<0.000000e+00> : vector<16x32xf32>
    %136 = tpu.matmul %134, %135, %cst_38 {dimension_numbers = #tpu.dot_dimension_numbers<[1], [0], [0], [1], [0, 0, 1, 1], [], []>} : vector<16x8xf32>, vector<8x32xf32>, vector<16x32xf32> -> vector<16x32xf32>
    %137 = arith.addf %119, %136 : vector<16x32xf32>
    %138 = vector.extract_strided_slice %42 {offsets = [0, 24], sizes = [16, 8], strides = [1, 1]} : vector<16x32xf32> to vector<16x8xf32>
    %139 = vector.extract_strided_slice %43 {offsets = [0, 24], sizes = [16, 8], strides = [1, 1]} : vector<16x32xf32> to vector<16x8xf32>
    %cst_39 = arith.constant dense<0.000000e+00> : vector<16x16xf32>
    %140 = tpu.matmul %138, %139, %cst_39 {dimension_numbers = #tpu.dot_dimension_numbers<[1], [1], [0], [0], [0, 0, 1, 0], [], []>} : vector<16x8xf32>, vector<16x8xf32>, vector<16x16xf32> -> vector<16x16xf32>
    %141 = arith.addf %140, %82 : vector<16x16xf32>
    %cst_40 = arith.constant dense<0xFF800000> : vector<16xf32>
    %142 = vector.multi_reduction <maximumf>, %141, %cst_40 [1] : vector<16x16xf32> to vector<16xf32>
    %143 = vector.shape_cast %142 : vector<16xf32> to vector<16x1xf32>
    %144 = vector.broadcast %143 : vector<16x1xf32> to vector<16x16xf32>
    %145 = arith.subf %141, %144 : vector<16x16xf32>
    %146 = math.exp %145 : vector<16x16xf32>
    %cst_41 = arith.constant dense<0.000000e+00> : vector<16xf32>
    %147 = vector.multi_reduction <add>, %146, %cst_41 [1] : vector<16x16xf32> to vector<16xf32>
    %148 = vector.shape_cast %147 : vector<16xf32> to vector<16x1xf32>
    %149 = vector.broadcast %148 : vector<16x1xf32> to vector<16x16xf32>
    %150 = arith.divf %146, %149 : vector<16x16xf32>
    %151 = vector.extract_strided_slice %44 {offsets = [0, 24], sizes = [16, 8], strides = [1, 1]} : vector<16x32xf32> to vector<16x8xf32>
    %cst_42 = arith.constant dense<0.000000e+00> : vector<16x8xf32>
    %152 = tpu.matmul %150, %151, %cst_42 {dimension_numbers = #tpu.dot_dimension_numbers<[1], [0], [0], [1], [0, 0, 1, 1], [], []>} : vector<16x16xf32>, vector<16x8xf32>, vector<16x8xf32> -> vector<16x8xf32>
    %153 = vector.extract_strided_slice %3 {offsets = [24, 0], sizes = [8, 32], strides = [1, 1]} : vector<32x32xf32> to vector<8x32xf32>
    %cst_43 = arith.constant dense<0.000000e+00> : vector<16x32xf32>
    %154 = tpu.matmul %152, %153, %cst_43 {dimension_numbers = #tpu.dot_dimension_numbers<[1], [0], [0], [1], [0, 0, 1, 1], [], []>} : vector<16x8xf32>, vector<8x32xf32>, vector<16x32xf32> -> vector<16x32xf32>
    %155 = arith.addf %137, %154 : vector<16x32xf32>
    %156 = arith.addf %0, %155 : vector<16x32xf32>
    %157 = vector.broadcast %12 : vector<1x32xf32> to vector<16x32xf32>
    %158 = arith.addf %156, %157 : vector<16x32xf32>
    %cst_44 = arith.constant dense<0.000000e+00> : vector<16xf32>
    %159 = vector.multi_reduction <add>, %158, %cst_44 [1] : vector<16x32xf32> to vector<16xf32>
    %160 = vector.shape_cast %159 : vector<16xf32> to vector<16x1xf32>
    %cst_45 = arith.constant 3.200000e+01 : f32
    %161 = vector.broadcast %cst_45 : f32 to vector<16x1xf32>
    %162 = arith.divf %160, %161 : vector<16x1xf32>
    %163 = vector.broadcast %162 : vector<16x1xf32> to vector<16x32xf32>
    %164 = arith.subf %158, %163 : vector<16x32xf32>
    %165 = arith.mulf %164, %164 : vector<16x32xf32>
    %cst_46 = arith.constant dense<0.000000e+00> : vector<16xf32>
    %166 = vector.multi_reduction <add>, %165, %cst_46 [1] : vector<16x32xf32> to vector<16xf32>
    %167 = vector.shape_cast %166 : vector<16xf32> to vector<16x1xf32>
    %cst_47 = arith.constant 3.200000e+01 : f32
    %168 = vector.broadcast %cst_47 : f32 to vector<16x1xf32>
    %169 = arith.divf %167, %168 : vector<16x1xf32>
    %170 = vector.broadcast %162 : vector<16x1xf32> to vector<16x32xf32>
    %171 = arith.subf %158, %170 : vector<16x32xf32>
    %cst_48 = arith.constant 9.99999974E-6 : f32
    %172 = vector.broadcast %cst_48 : f32 to vector<16x1xf32>
    %173 = arith.addf %169, %172 : vector<16x1xf32>
    %174 = math.rsqrt %173 : vector<16x1xf32>
    %175 = vector.broadcast %174 : vector<16x1xf32> to vector<16x32xf32>
    %176 = arith.mulf %171, %175 : vector<16x32xf32>
    %177 = vector.broadcast %9 : vector<1x32xf32> to vector<16x32xf32>
    %178 = arith.mulf %176, %177 : vector<16x32xf32>
    %179 = vector.broadcast %10 : vector<1x32xf32> to vector<16x32xf32>
    %180 = arith.addf %178, %179 : vector<16x32xf32>
    %cst_49 = arith.constant dense<0.000000e+00> : vector<16x128xf32>
    %181 = tpu.matmul %180, %4, %cst_49 {dimension_numbers = #tpu.dot_dimension_numbers<[1], [0], [0], [1], [0, 0, 1, 1], [], []>} : vector<16x32xf32>, vector<32x128xf32>, vector<16x128xf32> -> vector<16x128xf32>
    %182 = vector.broadcast %13 : vector<1x128xf32> to vector<16x128xf32>
    %183 = arith.addf %181, %182 : vector<16x128xf32>
    %cst_50 = arith.constant 1.702000e+00 : f32
    %184 = vector.broadcast %cst_50 : f32 to vector<16x128xf32>
    %185 = arith.mulf %184, %183 : vector<16x128xf32>
    %186 = arith.negf %185 : vector<16x128xf32>
    %187 = math.exp %186 : vector<16x128xf32>
    %cst_51 = arith.constant 1.000000e+00 : f32
    %188 = vector.broadcast %cst_51 : f32 to vector<16x128xf32>
    %189 = arith.addf %188, %187 : vector<16x128xf32>
    %190 = arith.divf %188, %189 : vector<16x128xf32>
    %191 = arith.mulf %183, %190 : vector<16x128xf32>
    %cst_52 = arith.constant 0.000000e+00 : f32
    %192 = vector.broadcast %cst_52 : f32 to vector<16x32xf32>
    %193 = vector.extract_strided_slice %191 {offsets = [0, 0], sizes = [16, 32], strides = [1, 1]} : vector<16x128xf32> to vector<16x32xf32>
    %194 = vector.extract_strided_slice %5 {offsets = [0, 0], sizes = [32, 32], strides = [1, 1]} : vector<32x128xf32> to vector<32x32xf32>
    %cst_53 = arith.constant dense<0.000000e+00> : vector<16x32xf32>
    %195 = tpu.matmul %193, %194, %cst_53 {dimension_numbers = #tpu.dot_dimension_numbers<[1], [0], [0], [1], [0, 0, 1, 1], [], []>} : vector<16x32xf32>, vector<32x32xf32>, vector<16x32xf32> -> vector<16x32xf32>
    %196 = arith.addf %192, %195 : vector<16x32xf32>
    %197 = vector.extract_strided_slice %191 {offsets = [0, 32], sizes = [16, 32], strides = [1, 1]} : vector<16x128xf32> to vector<16x32xf32>
    %198 = vector.extract_strided_slice %5 {offsets = [0, 32], sizes = [32, 32], strides = [1, 1]} : vector<32x128xf32> to vector<32x32xf32>
    %cst_54 = arith.constant dense<0.000000e+00> : vector<16x32xf32>
    %199 = tpu.matmul %197, %198, %cst_54 {dimension_numbers = #tpu.dot_dimension_numbers<[1], [0], [0], [1], [0, 0, 1, 1], [], []>} : vector<16x32xf32>, vector<32x32xf32>, vector<16x32xf32> -> vector<16x32xf32>
    %200 = arith.addf %196, %199 : vector<16x32xf32>
    %201 = vector.extract_strided_slice %191 {offsets = [0, 64], sizes = [16, 32], strides = [1, 1]} : vector<16x128xf32> to vector<16x32xf32>
    %202 = vector.extract_strided_slice %5 {offsets = [0, 64], sizes = [32, 32], strides = [1, 1]} : vector<32x128xf32> to vector<32x32xf32>
    %cst_55 = arith.constant dense<0.000000e+00> : vector<16x32xf32>
    %203 = tpu.matmul %201, %202, %cst_55 {dimension_numbers = #tpu.dot_dimension_numbers<[1], [0], [0], [1], [0, 0, 1, 1], [], []>} : vector<16x32xf32>, vector<32x32xf32>, vector<16x32xf32> -> vector<16x32xf32>
    %204 = arith.addf %200, %203 : vector<16x32xf32>
    %205 = vector.extract_strided_slice %191 {offsets = [0, 96], sizes = [16, 32], strides = [1, 1]} : vector<16x128xf32> to vector<16x32xf32>
    %206 = vector.extract_strided_slice %5 {offsets = [0, 96], sizes = [32, 32], strides = [1, 1]} : vector<32x128xf32> to vector<32x32xf32>
    %cst_56 = arith.constant dense<0.000000e+00> : vector<16x32xf32>
    %207 = tpu.matmul %205, %206, %cst_56 {dimension_numbers = #tpu.dot_dimension_numbers<[1], [0], [0], [1], [0, 0, 1, 1], [], []>} : vector<16x32xf32>, vector<32x32xf32>, vector<16x32xf32> -> vector<16x32xf32>
    %208 = arith.addf %204, %207 : vector<16x32xf32>
    %209 = arith.addf %158, %208 : vector<16x32xf32>
    %210 = vector.broadcast %14 : vector<1x32xf32> to vector<16x32xf32>
    %211 = arith.addf %209, %210 : vector<16x32xf32>
    %c0_57 = arith.constant 0 : index
    %c0_58 = arith.constant 0 : index
    %212 = vector.load %arg3[%c0_57, %c0_58] : memref<16x32xf32, #tpu.memory_space<vmem>>, vector<16x32xf32>
    tpu.vector_store %arg3[%c0_57, %c0_58], %211 {strides = array<i32>} : memref<16x32xf32, #tpu.memory_space<vmem>>, vector<16x32xf32>,
    return
  }
  func.func @transform_0(%arg0: i32) -> (i32, i32) {
    %c0_i32 = arith.constant 0 : i32
    %c0_i32_0 = arith.constant 0 : i32
    %c0_i32_1 = arith.constant 0 : i32
    return %c0_i32, %c0_i32_0 : i32, i32
  }
  func.func @transform_1(%arg0: i32) -> (i32, i32) {
    %c0_i32 = arith.constant 0 : i32
    %c0_i32_0 = arith.constant 0 : i32
    %c0_i32_1 = arith.constant 0 : i32
    return %c0_i32, %c0_i32_0 : i32, i32
  }
  func.func @transform_2(%arg0: i32) -> (i32, i32) {
    %c0_i32 = arith.constant 0 : i32
    %c0_i32_0 = arith.constant 0 : i32
    %c0_i32_1 = arith.constant 0 : i32
    return %c0_i32, %c0_i32_0 : i32, i32
  }
}

</mosaic_0001>

<llo_original>
// kernel: residual_attention_block.1
$region0: #{residual_attention_block.1}
  #allocation0 [shape = 'u32[]', space=smem, size = 0x4, offset = 0x4, fixed_abs, tag = 'smem constant byte address 0x4 - core index']
  #allocation1 [shape = 'u32[144,128]{1,0:T(1,128)}', space=vmem, size = 0x12000, scoped, tag = 'internal scratch']
  %s0 = inlined_call_operand.hbm [shape: f32[16,32], index: 0, kind: input, shape index: {}]
  %s1 = inlined_call_operand.hbm [shape: f32[104,128], index: 1, kind: input, shape index: {}]
  %s2 = inlined_call_operand.hbm [shape: f32[16,32], index: 2, kind: output, shape index: {}]
  %s3 = sld [smem:[#allocation0]]
  $region26: #{residual_attention_block.1} parent=0
    _
  %s5 = ssub.s32 1, %s3
  %s6 = scalar_select 0, %s5, %s3
  $region1: #{residual_attention_block.1} parent=0
    #allocation2 [shape = 'u8[8192]{0}', space=vmem, size = 0x2000, scoped, tag = 'input window, operand 0, single buffered']
    #allocation3 [shape = 's32[1]{0}', space=sflag, size = 0x4, scoped, tag = 'scoped memory for residual_attention_block.1']
    #allocation4 [shape = 's32[1]{0}', space=sflag, size = 0x4, scoped, tag = 'scoped memory for residual_attention_block.1']
    #allocation5 [shape = 'u8[53248]{0}', space=vmem, size = 0xd000, scoped, tag = 'input window, operand 1, single buffered']
    #allocation6 [shape = 's32[1]{0}', space=sflag, size = 0x4, scoped, tag = 'scoped memory for residual_attention_block.1']
    #allocation7 [shape = 'u8[8192]{0}', space=vmem, size = 0x2000, scoped, tag = 'output window, operand 0, single buffered']
    %7 = vsyncpa [#allocation3], 0
    %8 = vsyncpa [#allocation6], 0
    %9 = vsyncpa [#allocation4], 0
    // Predicated region
    $region2: #{residual_attention_block.1} parent=1 // pred_check
      _
    $region3: #{residual_attention_block.1} parent=1 // pred_check_branch
      %11 = sbr.rel (0) target = $region5
    $region4: #{residual_attention_block.1} parent=1 // pred_region
      %s13 = ssub.s32 256, 256
      %14 = vsyncadd [#allocation3], %s13
      %s15 = sshll.u32 [#allocation2], 4
      %s16 = int_to_ptr.vmem [resolvable:$true] %s15
      %21 = dma.hbm_to_vmem [thread:$0]  %s0, 256, %s16, [#allocation3], 128, 128, 8
    $region5: #{residual_attention_block.1} parent=1 // pred_fallthru
      _
    // Predicated region
    $region6: #{residual_attention_block.1} parent=1 // pred_check
      _
    $region7: #{residual_attention_block.1} parent=1 // pred_check_branch
      %23 = sbr.rel (0) target = $region9
    $region8: #{residual_attention_block.1} parent=1 // pred_region
      %s25 = ssub.s32 1664, 1664
      %26 = vsyncadd [#allocation6], %s25
      %s27 = sshll.u32 [#allocation5], 4
      %s28 = int_to_ptr.vmem [resolvable:$true] %s27
      %33 = dma.hbm_to_vmem [thread:$0]  %s1, 1664, %s28, [#allocation6], 128, 128, 8
    $region9: #{residual_attention_block.1} parent=1 // pred_fallthru
      _
    // Predicated region
    $region10: #{residual_attention_block.1} parent=1 // pred_check
      _
    $region11: #{residual_attention_block.1} parent=1 // pred_check_branch
      %35 = sbr.rel (0) target = $region13
    $region12: #{residual_attention_block.1} parent=1 // pred_region
      %36 = dma.done [#allocation3], 256
    $region13: #{residual_attention_block.1} parent=1 // pred_fallthru
      _
    // Predicated region
    $region14: #{residual_attention_block.1} parent=1 // pred_check
      _
    $region15: #{residual_attention_block.1} parent=1 // pred_check_branch
      %38 = sbr.rel (0) target = $region17
    $region16: #{residual_attention_block.1} parent=1 // pred_region
      %39 = dma.done [#allocation6], 1664
    $region17: #{residual_attention_block.1} parent=1 // pred_fallthru
      _
    %v40 = vld [vmem:[#allocation2] sm:$0xff]
    %v41 = vld [vmem:[#allocation2 + $0x8] sm:$0xff]
    %v42 = vld [vmem:[#allocation5] sm:$0xff]
    %v43 = vld [vmem:[#allocation5 + $0x8] sm:$0xff]
    %v44 = vld [vmem:[#allocation5 + $0x10] sm:$0xff]
    %v45 = vld [vmem:[#allocation5 + $0x18] sm:$0xff]
    %v46 = vld [vmem:[#allocation5 + $0x20] sm:$0xff]
    %v47 = vld [vmem:[#allocation5 + $0x28] sm:$0xff]
    %v48 = vld [vmem:[#allocation5 + $0x30] sm:$0xff]
    %v49 = vld [vmem:[#allocation5 + $0x38] sm:$0xff]
    %v50 = vld [vmem:[#allocation5 + $0x40] sm:$0xff]
    %v51 = vld [vmem:[#allocation5 + $0x48] sm:$0xff]
    %v52 = vld [vmem:[#allocation5 + $0x50] sm:$0xff]
    %v53 = vld [vmem:[#allocation5 + $0x58] sm:$0xff]
    %v54 = vld [vmem:[#allocation5 + $0x60] sm:$0xff]
    %vm55 = vcmask 261120
    %v56 = vsel %vm55, %v40, 0.0
    %57 = vadd.xlane.f32.xlu0 %v56
    %v58 = vpop.xlane.xlu0 %57
    %v59 = vsel %vm55, %v41, 0.0
    %60 = vadd.xlane.f32.xlu0 %v59
    %v61 = vpop.xlane.xlu0 %60
    %v62 = vrcp.pop 32.0
    %v63 = vmul.f32 %v58, %v62
    %v64 = vmul.f32 %v61, %v62
    %v65 = vsub.f32 %v40, %v63
    %v66 = vsub.f32 %v41, %v64
    %v67 = vmul.f32 %v65, %v65
    %v68 = vmul.f32 %v66, %v66
    %v69 = vsel %vm55, %v67, 0.0
    %70 = vadd.xlane.f32.xlu0 %v69
    %v71 = vpop.xlane.xlu0 %70
    %v72 = vsel %vm55, %v68, 0.0
    %73 = vadd.xlane.f32.xlu0 %v72
    %v74 = vpop.xlane.xlu0 %73
    %v75 = vmul.f32 %v71, %v62
    %v76 = vmul.f32 %v74, %v62
    %v77 = vadd.f32 %v75, 1e-05
    %v78 = vadd.f32 %v76, 1e-05
    %v79 = vrsqrt.pop %v77
    %v80 = vrsqrt.pop %v78
    %v81 = vmul.f32 %v65, %v79
    %v82 = vmul.f32 %v66, %v80
    %v83 = vlaneseq
    %v84 = vshrl.u32 %v83, 7
    %v85 = vsub.s32 0, %v84
    %v86 = vrot.slane %v54, %v85
    %v87 = vmul.f32 %v81, %v86
    %v88 = vmul.f32 %v82, %v86
    %v89 = vlaneseq
    %v90 = vshrl.u32 %v89, 7
    %v91 = vsub.s32 1, %v90
    %v92 = vrot.slane %v54, %v91
    %v93 = vadd.f32 %v87, %v92
    %v94 = vadd.f32 %v88, %v92
    %v95 = vlaneseq
    %v96 = vshrl.u32 %v95, 7
    %v97 = vsub.s32 4, %v96
    %v98 = vrot.slane %v54, %v97
    %v100 = vsel %vm55, %v93, 0
    %v103 = vsel %vm55, %v94, 0
    %105 = vmatprep.subr.mxu0 0.0
    %106 = vmatpush1.msra.mxu0 %v42
    %107 = vmatprep.subr.mxu0 0.0
    %108 = vmatpush1.msra.mxu0 %v43
    %109 = vmatprep.subr.mxu0 0.0
    %110 = vmatpush1.msra.mxu0 %v44
    %111 = vmatprep.subr.mxu0 0.0
    %112 = vmatpush1.msra.mxu0 %v45
    %113 = vmatprep.subr.mxu0 0.0
    %114 = vmatpush1.msra.mxu0 0.0
    %115 = vmatprep.subr.mxu0 0.0
    %116 = vmatpush1.msra.mxu0 0.0
    %117 = vmatprep.subr.mxu0 0.0
    %118 = vmatpush1.msra.mxu0 0.0
    %119 = vmatprep.subr.mxu0 0.0
    %120 = vmatpush1.msra.mxu0 0.0
    %121 = vmatprep.subr.mxu0 0.0
    %122 = vmatpush1.msra.mxu0 0.0
    %123 = vmatprep.subr.mxu0 0.0
    %124 = vmatpush1.msra.mxu0 0.0
    %125 = vmatprep.subr.mxu0 0.0
    %126 = vmatpush1.msra.mxu0 0.0
    %127 = vmatprep.subr.mxu0 0.0
    %128 = vmatpush1.msra.mxu0 0.0
    %129 = vmatprep.subr.mxu0 0.0
    %130 = vmatpush1.msra.mxu0 0.0
    %131 = vmatprep.subr.mxu0 0.0
    %132 = vmatpush1.msra.mxu0 0.0
    %133 = vmatprep.subr.mxu0 0.0
    %134 = vmatpush1.msra.mxu0 0.0
    %135 = vmatprep.subr.mxu0 0.0
    %136 = vmatpush1.msra.mxu0 0.0
    %137 = vmatprep.subr.mxu0 0.0
    %138 = vmatpush1.msra.mxu0 0.0
    %139 = vmatprep.subr.mxu0 0.0
    %140 = vmatpush1.msra.mxu0 0.0
    %141 = vmatprep.subr.mxu0 0.0
    %142 = vmatpush1.msra.mxu0 0.0
    %143 = vmatprep.subr.mxu0 0.0
    %144 = vmatpush1.msra.mxu0 0.0
    %145 = vmatprep.subr.mxu0 0.0
    %146 = vmatpush1.msra.mxu0 0.0
    %147 = vmatprep.subr.mxu0 0.0
    %148 = vmatpush1.msra.mxu0 0.0
    %149 = vmatprep.subr.mxu0 0.0
    %150 = vmatpush1.msra.mxu0 0.0
    %151 = vmatprep.subr.mxu0 0.0
    %152 = vmatpush1.msra.mxu0 0.0
    %153 = vmatprep.subr.mxu0 0.0
    %154 = vmatpush1.msra.mxu0 0.0
    %155 = vmatprep.subr.mxu0 0.0
    %156 = vmatpush1.msra.mxu0 0.0
    %157 = vmatprep.subr.mxu0 0.0
    %158 = vmatpush1.msra.mxu0 0.0
    %159 = vmatprep.subr.mxu0 0.0
    %160 = vmatpush1.msra.mxu0 0.0
    %161 = vmatprep.subr.mxu0 0.0
    %162 = vmatpush1.msra.mxu0 0.0
    %163 = vmatprep.subr.mxu0 0.0
    %164 = vmatpush1.msra.mxu0 0.0
    %165 = vmatprep.subr.mxu0 0.0
    %166 = vmatpush1.msra.mxu0 0.0
    %167 = vmatprep.subr.mxu0 0.0
    %168 = vmatpush1.msra.mxu0 0.0
    %169 = vmatprep.mubr.f32.mxu0 0.0
    %170 = vmatmul.mubr.f32.gmra.mrb[0].mxu0 %v100
    %v171 = vpop.f32.mrb[0].mxu0
    %v172 = vadd.f32 %v98, %v171
    %v173 = vpop.f32.mrb[0].mxu0
    %174 = vmatprep.mubr.f32.mxu0 0.0
    %175 = vmatmul.mubr.f32.gmra.mrb[0].mxu0 %v103
    %v176 = vpop.f32.mrb[0].mxu0
    %v177 = vadd.f32 %v98, %v176
    %v178 = vpop.f32.mrb[0].mxu0
    %179 = vdwg.mxu0
    %v180 = vmul.f32 %v172, 0.35355338
    %v181 = vmul.f32 %v177, 0.35355338
    %v182 = vlaneseq
    %v183 = vshrl.u32 %v182, 7
    %v184 = vadd.s32 %v183, 8
    %vm185 = vcmp.lt.s32.totalorder %v183, 0
    %v186 = vsub.s32 0, %v183
    %v187 = vsel %vm185, %v186, %v183
    %v188 = vshrl.u32 %v187, 1
    %v189 = vand.u32 %v187, 1
    %v190 = vsub.s32 0, %v189
    %v191 = vsel %vm185, %v190, %v189
    %vm192 = vcmp.lt.s32.totalorder %v184, 0
    %v193 = vsub.s32 0, %v184
    %v194 = vsel %vm192, %v193, %v184
    %v195 = vshrl.u32 %v194, 1
    %v196 = vand.u32 %v194, 1
    %v197 = vsub.s32 0, %v196
    %v198 = vsel %vm192, %v197, %v196
    %vm199 = vcmp.ne.s32.totalorder %v191, 0
    %vm200 = vcmp.ne.s32.totalorder %v198, 0
    %vm201 = vcmp.lt.s32.totalorder %v191, 0
    %vm202 = vcmp.lt.s32.totalorder %v198, 0
    %vm203 = vmand %vm201, %vm199
    %vm204 = vmand %vm202, %vm200
    %v205 = vadd.s32 %v191, 2
    %v206 = vadd.s32 %v198, 2
    %v207 = vsel %vm203, %v205, %v191
    %v208 = vsel %vm204, %v206, %v198
    %v209 = vlaneseq
    %v210 = vand.u32 %v209, 127
    %vm211 = vcmp.lt.s32.totalorder %v210, 0
    %v212 = vsub.s32 0, %v210
    %v213 = vsel %vm211, %v212, %v210
    %v214 = vshrl.u32 %v213, 1
    %v215 = vand.u32 %v213, 1
    %v216 = vsub.s32 0, %v215
    %v217 = vsel %vm211, %v216, %v215
    %vm218 = vcmp.ne.s32.totalorder %v217, 0
    %vm219 = vcmp.lt.s32.totalorder %v217, 0
    %vm220 = vmand %vm219, %vm218
    %v221 = vadd.s32 %v217, 2
    %v222 = vsel %vm220, %v221, %v217
    %vm223 = vcmp.eq.s32.totalorder %v207, %v222
    %vm224 = vcmp.eq.s32.totalorder %v208, %v222
    %v225 = vsel %vm223, 0.0, -1e+30
    %v226 = vsel %vm224, 0.0, -1e+30
    %229 = vrot.lane.b32.xlu0 %v172, 96
    %v230 = vpop.permute.xlu0 %229
    %231 = vrot.lane.b32.xlu0 %v177, 96
    %v232 = vpop.permute.xlu0 %231
    %vm233 = vcmask 64512
    %v235 = vsel %vm233, %v180, 0
    %v238 = vsel %vm233, %v181, 0
    %v240 = vsel %vm233, %v230, 0
    %v242 = vsel %vm233, %v232, 0
    %244 = vmatprep.subr.mxu0 0.0
    %245 = vmatpush1.xpose.msra.mxu0 %v240
    %246 = vmatprep.subr.mxu0 0.0
    %247 = vmatpush1.xpose.msra.mxu0 %v242
    %248 = vmatprep.subr.mxu0 0.0
    %249 = vmatpush1.xpose.msra.mxu0 0.0
    %250 = vmatprep.subr.mxu0 0.0
    %251 = vmatpush1.xpose.msra.mxu0 0.0
    %252 = vmatprep.subr.mxu0 0.0
    %253 = vmatpush1.xpose.msra.mxu0 0.0
    %254 = vmatprep.subr.mxu0 0.0
    %255 = vmatpush1.xpose.msra.mxu0 0.0
    %256 = vmatprep.subr.mxu0 0.0
    %257 = vmatpush1.xpose.msra.mxu0 0.0
    %258 = vmatprep.subr.mxu0 0.0
    %259 = vmatpush1.xpose.msra.mxu0 0.0
    %260 = vmatprep.subr.mxu0 0.0
    %261 = vmatpush1.xpose.msra.mxu0 0.0
    %262 = vmatprep.subr.mxu0 0.0
    %263 = vmatpush1.xpose.msra.mxu0 0.0
    %264 = vmatprep.subr.mxu0 0.0
    %265 = vmatpush1.xpose.msra.mxu0 0.0
    %266 = vmatprep.subr.mxu0 0.0
    %267 = vmatpush1.xpose.msra.mxu0 0.0
    %268 = vmatprep.subr.mxu0 0.0
    %269 = vmatpush1.xpose.msra.mxu0 0.0
    %270 = vmatprep.subr.mxu0 0.0
    %271 = vmatpush1.xpose.msra.mxu0 0.0
    %272 = vmatprep.subr.mxu0 0.0
    %273 = vmatpush1.xpose.msra.mxu0 0.0
    %274 = vmatprep.subr.mxu0 0.0
    %275 = vmatpush1.xpose.msra.mxu0 0.0
    %276 = vmatprep.subr.mxu0 0.0
    %277 = vmatpush1.xpose.msra.mxu0 0.0
    %278 = vmatprep.subr.mxu0 0.0
    %279 = vmatpush1.xpose.msra.mxu0 0.0
    %280 = vmatprep.subr.mxu0 0.0
    %281 = vmatpush1.xpose.msra.mxu0 0.0
    %282 = vmatprep.subr.mxu0 0.0
    %283 = vmatpush1.xpose.msra.mxu0 0.0
    %284 = vmatprep.subr.mxu0 0.0
    %285 = vmatpush1.xpose.msra.mxu0 0.0
    %286 = vmatprep.subr.mxu0 0.0
    %287 = vmatpush1.xpose.msra.mxu0 0.0
    %288 = vmatprep.subr.mxu0 0.0
    %289 = vmatpush1.xpose.msra.mxu0 0.0
    %290 = vmatprep.subr.mxu0 0.0
    %291 = vmatpush1.xpose.msra.mxu0 0.0
    %292 = vmatprep.subr.mxu0 0.0
    %293 = vmatpush1.xpose.msra.mxu0 0.0
    %294 = vmatprep.subr.mxu0 0.0
    %295 = vmatpush1.xpose.msra.mxu0 0.0
    %296 = vmatprep.subr.mxu0 0.0
    %297 = vmatpush1.xpose.msra.mxu0 0.0
    %298 = vmatprep.subr.mxu0 0.0
    %299 = vmatpush1.xpose.msra.mxu0 0.0
    %300 = vmatprep.subr.mxu0 0.0
    %301 = vmatpush1.xpose.msra.mxu0 0.0
    %302 = vmatprep.subr.mxu0 0.0
    %303 = vmatpush1.xpose.msra.mxu0 0.0
    %304 = vmatprep.subr.mxu0 0.0
    %305 = vmatpush1.xpose.msra.mxu0 0.0
    %306 = vmatprep.subr.mxu0 0.0
    %307 = vmatpush1.xpose.msra.mxu0 0.0
    %308 = vmatprep.mubr.f32.mxu0 0.0
    %309 = vmatmul.mubr.f32.gmra.mrb[0].mxu0 %v235
    %v310 = vpop.f32.mrb[0].mxu0
    %v311 = vadd.f32 %v225, %v310
    %v312 = vpop.f32.mrb[0].mxu0
    %313 = vmatprep.mubr.f32.mxu0 0.0
    %314 = vmatmul.mubr.f32.gmra.mrb[0].mxu0 %v238
    %v315 = vpop.f32.mrb[0].mxu0
    %v316 = vadd.f32 %v226, %v315
    %v317 = vpop.f32.mrb[0].mxu0
    %318 = vdwg.mxu0
    %vm319 = vcmask 130048
    %v320 = vsel %vm319, %v311, -inf
    %321 = vmax.xlane.f32.xlu0 %v320
    %v322 = vpop.xlane.xlu0 %321
    %v323 = vsel %vm319, %v316, -inf
    %324 = vmax.xlane.f32.xlu0 %v323
    %v325 = vpop.xlane.xlu0 %324
    %v326 = vsub.f32 %v311, %v322
    %v327 = vsub.f32 %v316, %v325
    %v328 = vmul.f32 %v326, 1.442695
    %v329 = vpow.pop %v328
    %v330 = vmul.f32 %v327, 1.442695
    %v331 = vpow.pop %v330
    %v332 = vsel %vm319, %v329, 0.0
    %333 = vadd.xlane.f32.xlu0 %v332
    %v334 = vpop.xlane.xlu0 %333
    %v335 = vsel %vm319, %v331, 0.0
    %336 = vadd.xlane.f32.xlu0 %v335
    %v337 = vpop.xlane.xlu0 %336
    %v338 = vrcp.pop %v334
    %v339 = vmul.f32 %v329, %v338
    %v340 = vrcp.pop %v337
    %v341 = vmul.f32 %v331, %v340
    %342 = vrot.lane.b32.xlu0 %v172, 64
    %v343 = vpop.permute.xlu0 %342
    %344 = vrot.lane.b32.xlu0 %v177, 64
    %v345 = vpop.permute.xlu0 %344
    %v349 = vsel %vm319, %v339, 0
    %v352 = vsel %vm319, %v341, 0
    %354 = vmatprep.subr.mxu0 0.0
    %355 = vmatpush1.msra.mxu0 %v343
    %356 = vmatprep.subr.mxu0 0.0
    %357 = vmatpush1.msra.mxu0 %v345
    %358 = vmatprep.subr.mxu0 0.0
    %359 = vmatpush1.msra.mxu0 0.0
    %360 = vmatprep.subr.mxu0 0.0
    %361 = vmatpush1.msra.mxu0 0.0
    %362 = vmatprep.subr.mxu0 0.0
    %363 = vmatpush1.msra.mxu0 0.0
    %364 = vmatprep.subr.mxu0 0.0
    %365 = vmatpush1.msra.mxu0 0.0
    %366 = vmatprep.subr.mxu0 0.0
    %367 = vmatpush1.msra.mxu0 0.0
    %368 = vmatprep.subr.mxu0 0.0
    %369 = vmatpush1.msra.mxu0 0.0
    %370 = vmatprep.subr.mxu0 0.0
    %371 = vmatpush1.msra.mxu0 0.0
    %372 = vmatprep.subr.mxu0 0.0
    %373 = vmatpush1.msra.mxu0 0.0
    %374 = vmatprep.subr.mxu0 0.0
    %375 = vmatpush1.msra.mxu0 0.0
    %376 = vmatprep.subr.mxu0 0.0
    %377 = vmatpush1.msra.mxu0 0.0
    %378 = vmatprep.subr.mxu0 0.0
    %379 = vmatpush1.msra.mxu0 0.0
    %380 = vmatprep.subr.mxu0 0.0
    %381 = vmatpush1.msra.mxu0 0.0
    %382 = vmatprep.subr.mxu0 0.0
    %383 = vmatpush1.msra.mxu0 0.0
    %384 = vmatprep.subr.mxu0 0.0
    %385 = vmatpush1.msra.mxu0 0.0
    %386 = vmatprep.subr.mxu0 0.0
    %387 = vmatpush1.msra.mxu0 0.0
    %388 = vmatprep.subr.mxu0 0.0
    %389 = vmatpush1.msra.mxu0 0.0
    %390 = vmatprep.subr.mxu0 0.0
    %391 = vmatpush1.msra.mxu0 0.0
    %392 = vmatprep.subr.mxu0 0.0
    %393 = vmatpush1.msra.mxu0 0.0
    %394 = vmatprep.subr.mxu0 0.0
    %395 = vmatpush1.msra.mxu0 0.0
    %396 = vmatprep.subr.mxu0 0.0
    %397 = vmatpush1.msra.mxu0 0.0
    %398 = vmatprep.subr.mxu0 0.0
    %399 = vmatpush1.msra.mxu0 0.0
    %400 = vmatprep.subr.mxu0 0.0
    %401 = vmatpush1.msra.mxu0 0.0
    %402 = vmatprep.subr.mxu0 0.0
    %403 = vmatpush1.msra.mxu0 0.0
    %404 = vmatprep.subr.mxu0 0.0
    %405 = vmatpush1.msra.mxu0 0.0
    %406 = vmatprep.subr.mxu0 0.0
    %407 = vmatpush1.msra.mxu0 0.0
    %408 = vmatprep.subr.mxu0 0.0
    %409 = vmatpush1.msra.mxu0 0.0
    %410 = vmatprep.subr.mxu0 0.0
    %411 = vmatpush1.msra.mxu0 0.0
    %412 = vmatprep.subr.mxu0 0.0
    %413 = vmatpush1.msra.mxu0 0.0
    %414 = vmatprep.subr.mxu0 0.0
    %415 = vmatpush1.msra.mxu0 0.0
    %416 = vmatprep.subr.mxu0 0.0
    %417 = vmatpush1.msra.mxu0 0.0
    %418 = vmatprep.mubr.f32.mxu0 0.0
    %419 = vmatmul.mubr.f32.gmra.mrb[0].mxu0 %v349
    %v420 = vpop.f32.mrb[0].mxu0
    %v421 = vadd.f32 0.0, %v420
    %v422 = vpop.f32.mrb[0].mxu0
    %423 = vmatprep.mubr.f32.mxu0 0.0
    %424 = vmatmul.mubr.f32.gmra.mrb[0].mxu0 %v352
    %v425 = vpop.f32.mrb[0].mxu0
    %v426 = vadd.f32 0.0, %v425
    %v427 = vpop.f32.mrb[0].mxu0
    %428 = vdwg.mxu0
    %429 = vrot.lane.b32.xlu0 %v180, 120
    %v430 = vpop.permute.xlu0 %429
    %431 = vrot.lane.b32.xlu0 %v181, 120
    %v432 = vpop.permute.xlu0 %431
    %433 = vrot.lane.b32.xlu0 %v172, 88
    %v434 = vpop.permute.xlu0 %433
    %435 = vrot.lane.b32.xlu0 %v177, 88
    %v436 = vpop.permute.xlu0 %435
    %v437 = vsel %vm233, %v430, 0
    %v439 = vsel %vm233, %v432, 0
    %v441 = vsel %vm233, %v434, 0
    %v443 = vsel %vm233, %v436, 0
    %445 = vmatprep.subr.mxu0 0.0
    %446 = vmatpush1.xpose.msra.mxu0 %v441
    %447 = vmatprep.subr.mxu0 0.0
    %448 = vmatpush1.xpose.msra.mxu0 %v443
    %449 = vmatprep.subr.mxu0 0.0
    %450 = vmatpush1.xpose.msra.mxu0 0.0
    %451 = vmatprep.subr.mxu0 0.0
    %452 = vmatpush1.xpose.msra.mxu0 0.0
    %453 = vmatprep.subr.mxu0 0.0
    %454 = vmatpush1.xpose.msra.mxu0 0.0
    %455 = vmatprep.subr.mxu0 0.0
    %456 = vmatpush1.xpose.msra.mxu0 0.0
    %457 = vmatprep.subr.mxu0 0.0
    %458 = vmatpush1.xpose.msra.mxu0 0.0
    %459 = vmatprep.subr.mxu0 0.0
    %460 = vmatpush1.xpose.msra.mxu0 0.0
    %461 = vmatprep.subr.mxu0 0.0
    %462 = vmatpush1.xpose.msra.mxu0 0.0
    %463 = vmatprep.subr.mxu0 0.0
    %464 = vmatpush1.xpose.msra.mxu0 0.0
    %465 = vmatprep.subr.mxu0 0.0
    %466 = vmatpush1.xpose.msra.mxu0 0.0
    %467 = vmatprep.subr.mxu0 0.0
    %468 = vmatpush1.xpose.msra.mxu0 0.0
    %469 = vmatprep.subr.mxu0 0.0
    %470 = vmatpush1.xpose.msra.mxu0 0.0
    %471 = vmatprep.subr.mxu0 0.0
    %472 = vmatpush1.xpose.msra.mxu0 0.0
    %473 = vmatprep.subr.mxu0 0.0
    %474 = vmatpush1.xpose.msra.mxu0 0.0
    %475 = vmatprep.subr.mxu0 0.0
    %476 = vmatpush1.xpose.msra.mxu0 0.0
    %477 = vmatprep.subr.mxu0 0.0
    %478 = vmatpush1.xpose.msra.mxu0 0.0
    %479 = vmatprep.subr.mxu0 0.0
    %480 = vmatpush1.xpose.msra.mxu0 0.0
    %481 = vmatprep.subr.mxu0 0.0
    %482 = vmatpush1.xpose.msra.mxu0 0.0
    %483 = vmatprep.subr.mxu0 0.0
    %484 = vmatpush1.xpose.msra.mxu0 0.0
    %485 = vmatprep.subr.mxu0 0.0
    %486 = vmatpush1.xpose.msra.mxu0 0.0
    %487 = vmatprep.subr.mxu0 0.0
    %488 = vmatpush1.xpose.msra.mxu0 0.0
    %489 = vmatprep.subr.mxu0 0.0
    %490 = vmatpush1.xpose.msra.mxu0 0.0
    %491 = vmatprep.subr.mxu0 0.0
    %492 = vmatpush1.xpose.msra.mxu0 0.0
    %493 = vmatprep.subr.mxu0 0.0
    %494 = vmatpush1.xpose.msra.mxu0 0.0
    %495 = vmatprep.subr.mxu0 0.0
    %496 = vmatpush1.xpose.msra.mxu0 0.0
    %497 = vmatprep.subr.mxu0 0.0
    %498 = vmatpush1.xpose.msra.mxu0 0.0
    %499 = vmatprep.subr.mxu0 0.0
    %500 = vmatpush1.xpose.msra.mxu0 0.0
    %501 = vmatprep.subr.mxu0 0.0
    %502 = vmatpush1.xpose.msra.mxu0 0.0
    %503 = vmatprep.subr.mxu0 0.0
    %504 = vmatpush1.xpose.msra.mxu0 0.0
    %505 = vmatprep.subr.mxu0 0.0
    %506 = vmatpush1.xpose.msra.mxu0 0.0
    %507 = vmatprep.subr.mxu0 0.0
    %508 = vmatpush1.xpose.msra.mxu0 0.0
    %509 = vmatprep.mubr.f32.mxu0 0.0
    %510 = vmatmul.mubr.f32.gmra.mrb[0].mxu0 %v437
    %v511 = vpop.f32.mrb[0].mxu0
    %v512 = vadd.f32 %v225, %v511
    %v513 = vpop.f32.mrb[0].mxu0
    %514 = vmatprep.mubr.f32.mxu0 0.0
    %515 = vmatmul.mubr.f32.gmra.mrb[0].mxu0 %v439
    %v516 = vpop.f32.mrb[0].mxu0
    %v517 = vadd.f32 %v226, %v516
    %v518 = vpop.f32.mrb[0].mxu0
    %519 = vdwg.mxu0
    %v520 = vsel %vm319, %v512, -inf
    %521 = vmax.xlane.f32.xlu0 %v520
    %v522 = vpop.xlane.xlu0 %521
    %v523 = vsel %vm319, %v517, -inf
    %524 = vmax.xlane.f32.xlu0 %v523
    %v525 = vpop.xlane.xlu0 %524
    %v526 = vsub.f32 %v512, %v522
    %v527 = vsub.f32 %v517, %v525
    %v528 = vmul.f32 %v526, 1.442695
    %v529 = vpow.pop %v528
    %v530 = vmul.f32 %v527, 1.442695
    %v531 = vpow.pop %v530
    %v532 = vsel %vm319, %v529, 0.0
    %533 = vadd.xlane.f32.xlu0 %v532
    %v534 = vpop.xlane.xlu0 %533
    %v535 = vsel %vm319, %v531, 0.0
    %536 = vadd.xlane.f32.xlu0 %v535
    %v537 = vpop.xlane.xlu0 %536
    %v538 = vrcp.pop %v534
    %v539 = vmul.f32 %v529, %v538
    %v540 = vrcp.pop %v537
    %v541 = vmul.f32 %v531, %v540
    %542 = vrot.lane.b32.xlu0 %v172, 56
    %v543 = vpop.permute.xlu0 %542
    %544 = vrot.lane.b32.xlu0 %v177, 56
    %v545 = vpop.permute.xlu0 %544
    %v549 = vsel %vm319, %v539, 0
    %v552 = vsel %vm319, %v541, 0
    %554 = vmatprep.subr.mxu0 0.0
    %555 = vmatpush1.msra.mxu0 %v543
    %556 = vmatprep.subr.mxu0 0.0
    %557 = vmatpush1.msra.mxu0 %v545
    %558 = vmatprep.subr.mxu0 0.0
    %559 = vmatpush1.msra.mxu0 0.0
    %560 = vmatprep.subr.mxu0 0.0
    %561 = vmatpush1.msra.mxu0 0.0
    %562 = vmatprep.subr.mxu0 0.0
    %563 = vmatpush1.msra.mxu0 0.0
    %564 = vmatprep.subr.mxu0 0.0
    %565 = vmatpush1.msra.mxu0 0.0
    %566 = vmatprep.subr.mxu0 0.0
    %567 = vmatpush1.msra.mxu0 0.0
    %568 = vmatprep.subr.mxu0 0.0
    %569 = vmatpush1.msra.mxu0 0.0
    %570 = vmatprep.subr.mxu0 0.0
    %571 = vmatpush1.msra.mxu0 0.0
    %572 = vmatprep.subr.mxu0 0.0
    %573 = vmatpush1.msra.mxu0 0.0
    %574 = vmatprep.subr.mxu0 0.0
    %575 = vmatpush1.msra.mxu0 0.0
    %576 = vmatprep.subr.mxu0 0.0
    %577 = vmatpush1.msra.mxu0 0.0
    %578 = vmatprep.subr.mxu0 0.0
    %579 = vmatpush1.msra.mxu0 0.0
    %580 = vmatprep.subr.mxu0 0.0
    %581 = vmatpush1.msra.mxu0 0.0
    %582 = vmatprep.subr.mxu0 0.0
    %583 = vmatpush1.msra.mxu0 0.0
    %584 = vmatprep.subr.mxu0 0.0
    %585 = vmatpush1.msra.mxu0 0.0
    %586 = vmatprep.subr.mxu0 0.0
    %587 = vmatpush1.msra.mxu0 0.0
    %588 = vmatprep.subr.mxu0 0.0
    %589 = vmatpush1.msra.mxu0 0.0
    %590 = vmatprep.subr.mxu0 0.0
    %591 = vmatpush1.msra.mxu0 0.0
    %592 = vmatprep.subr.mxu0 0.0
    %593 = vmatpush1.msra.mxu0 0.0
    %594 = vmatprep.subr.mxu0 0.0
    %595 = vmatpush1.msra.mxu0 0.0
    %596 = vmatprep.subr.mxu0 0.0
    %597 = vmatpush1.msra.mxu0 0.0
    %598 = vmatprep.subr.mxu0 0.0
    %599 = vmatpush1.msra.mxu0 0.0
    %600 = vmatprep.subr.mxu0 0.0
    %601 = vmatpush1.msra.mxu0 0.0
    %602 = vmatprep.subr.mxu0 0.0
    %603 = vmatpush1.msra.mxu0 0.0
    %604 = vmatprep.subr.mxu0 0.0
    %605 = vmatpush1.msra.mxu0 0.0
    %606 = vmatprep.subr.mxu0 0.0
    %607 = vmatpush1.msra.mxu0 0.0
    %608 = vmatprep.subr.mxu0 0.0
    %609 = vmatpush1.msra.mxu0 0.0
    %610 = vmatprep.subr.mxu0 0.0
    %611 = vmatpush1.msra.mxu0 0.0
    %612 = vmatprep.subr.mxu0 0.0
    %613 = vmatpush1.msra.mxu0 0.0
    %614 = vmatprep.subr.mxu0 0.0
    %615 = vmatpush1.msra.mxu0 0.0
    %616 = vmatprep.subr.mxu0 0.0
    %617 = vmatpush1.msra.mxu0 0.0
    %618 = vmatprep.mubr.f32.mxu0 0.0
    %619 = vmatmul.mubr.f32.gmra.mrb[0].mxu0 %v549
    %v620 = vpop.f32.mrb[0].mxu0
    %v621 = vadd.f32 0.0, %v620
    %v622 = vpop.f32.mrb[0].mxu0
    %623 = vmatprep.mubr.f32.mxu0 0.0
    %624 = vmatmul.mubr.f32.gmra.mrb[0].mxu0 %v552
    %v625 = vpop.f32.mrb[0].mxu0
    %v626 = vadd.f32 0.0, %v625
    %v627 = vpop.f32.mrb[0].mxu0
    %628 = vdwg.mxu0
    %630 = vrot.lane.b32.xlu0 %v43, 32
    %v631 = vpop.permute.xlu0 %630
    %v634 = vsel %vm233, %v621, 0
    %v637 = vsel %vm233, %v626, 0
    %639 = vmatprep.subr.mxu0 0.0
    %640 = vmatpush1.msra.mxu0 %v631
    %641 = vmatprep.subr.mxu0 0.0
    %642 = vmatpush1.msra.mxu0 0.0
    %643 = vmatprep.subr.mxu0 0.0
    %644 = vmatpush1.msra.mxu0 0.0
    %645 = vmatprep.subr.mxu0 0.0
    %646 = vmatpush1.msra.mxu0 0.0
    %647 = vmatprep.subr.mxu0 0.0
    %648 = vmatpush1.msra.mxu0 0.0
    %649 = vmatprep.subr.mxu0 0.0
    %650 = vmatpush1.msra.mxu0 0.0
    %651 = vmatprep.subr.mxu0 0.0
    %652 = vmatpush1.msra.mxu0 0.0
    %653 = vmatprep.subr.mxu0 0.0
    %654 = vmatpush1.msra.mxu0 0.0
    %655 = vmatprep.subr.mxu0 0.0
    %656 = vmatpush1.msra.mxu0 0.0
    %657 = vmatprep.subr.mxu0 0.0
    %658 = vmatpush1.msra.mxu0 0.0
    %659 = vmatprep.subr.mxu0 0.0
    %660 = vmatpush1.msra.mxu0 0.0
    %661 = vmatprep.subr.mxu0 0.0
    %662 = vmatpush1.msra.mxu0 0.0
    %663 = vmatprep.subr.mxu0 0.0
    %664 = vmatpush1.msra.mxu0 0.0
    %665 = vmatprep.subr.mxu0 0.0
    %666 = vmatpush1.msra.mxu0 0.0
    %667 = vmatprep.subr.mxu0 0.0
    %668 = vmatpush1.msra.mxu0 0.0
    %669 = vmatprep.subr.mxu0 0.0
    %670 = vmatpush1.msra.mxu0 0.0
    %671 = vmatprep.subr.mxu0 0.0
    %672 = vmatpush1.msra.mxu0 0.0
    %673 = vmatprep.subr.mxu0 0.0
    %674 = vmatpush1.msra.mxu0 0.0
    %675 = vmatprep.subr.mxu0 0.0
    %676 = vmatpush1.msra.mxu0 0.0
    %677 = vmatprep.subr.mxu0 0.0
    %678 = vmatpush1.msra.mxu0 0.0
    %679 = vmatprep.subr.mxu0 0.0
    %680 = vmatpush1.msra.mxu0 0.0
    %681 = vmatprep.subr.mxu0 0.0
    %682 = vmatpush1.msra.mxu0 0.0
    %683 = vmatprep.subr.mxu0 0.0
    %684 = vmatpush1.msra.mxu0 0.0
    %685 = vmatprep.subr.mxu0 0.0
    %686 = vmatpush1.msra.mxu0 0.0
    %687 = vmatprep.subr.mxu0 0.0
    %688 = vmatpush1.msra.mxu0 0.0
    %689 = vmatprep.subr.mxu0 0.0
    %690 = vmatpush1.msra.mxu0 0.0
    %691 = vmatprep.subr.mxu0 0.0
    %692 = vmatpush1.msra.mxu0 0.0
    %693 = vmatprep.subr.mxu0 0.0
    %694 = vmatpush1.msra.mxu0 0.0
    %695 = vmatprep.subr.mxu0 0.0
    %696 = vmatpush1.msra.mxu0 0.0
    %697 = vmatprep.subr.mxu0 0.0
    %698 = vmatpush1.msra.mxu0 0.0
    %699 = vmatprep.subr.mxu0 0.0
    %700 = vmatpush1.msra.mxu0 0.0
    %701 = vmatprep.subr.mxu0 0.0
    %702 = vmatpush1.msra.mxu0 0.0
    %703 = vmatprep.mubr.f32.mxu0 0.0
    %704 = vmatmul.mubr.f32.gmra.mrb[0].mxu0 %v634
    %v705 = vpop.f32.mrb[0].mxu0
    %v706 = vadd.f32 0.0, %v705
    %v707 = vpop.f32.mrb[0].mxu0
    %708 = vmatprep.mubr.f32.mxu0 0.0
    %709 = vmatmul.mubr.f32.gmra.mrb[0].mxu0 %v637
    %v710 = vpop.f32.mrb[0].mxu0
    %v711 = vadd.f32 0.0, %v710
    %v712 = vpop.f32.mrb[0].mxu0
    %713 = vdwg.mxu0
    %715 = vrot.lane.b32.xlu0 %v42, 32
    %v716 = vpop.permute.xlu0 %715
    %v719 = vsel %vm233, %v421, 0
    %v722 = vsel %vm233, %v426, 0
    %724 = vmatprep.subr.mxu0 0.0
    %725 = vmatpush1.msra.mxu0 %v716
    %726 = vmatprep.subr.mxu0 0.0
    %727 = vmatpush1.msra.mxu0 0.0
    %728 = vmatprep.subr.mxu0 0.0
    %729 = vmatpush1.msra.mxu0 0.0
    %730 = vmatprep.subr.mxu0 0.0
    %731 = vmatpush1.msra.mxu0 0.0
    %732 = vmatprep.subr.mxu0 0.0
    %733 = vmatpush1.msra.mxu0 0.0
    %734 = vmatprep.subr.mxu0 0.0
    %735 = vmatpush1.msra.mxu0 0.0
    %736 = vmatprep.subr.mxu0 0.0
    %737 = vmatpush1.msra.mxu0 0.0
    %738 = vmatprep.subr.mxu0 0.0
    %739 = vmatpush1.msra.mxu0 0.0
    %740 = vmatprep.subr.mxu0 0.0
    %741 = vmatpush1.msra.mxu0 0.0
    %742 = vmatprep.subr.mxu0 0.0
    %743 = vmatpush1.msra.mxu0 0.0
    %744 = vmatprep.subr.mxu0 0.0
    %745 = vmatpush1.msra.mxu0 0.0
    %746 = vmatprep.subr.mxu0 0.0
    %747 = vmatpush1.msra.mxu0 0.0
    %748 = vmatprep.subr.mxu0 0.0
    %749 = vmatpush1.msra.mxu0 0.0
    %750 = vmatprep.subr.mxu0 0.0
    %751 = vmatpush1.msra.mxu0 0.0
    %752 = vmatprep.subr.mxu0 0.0
    %753 = vmatpush1.msra.mxu0 0.0
    %754 = vmatprep.subr.mxu0 0.0
    %755 = vmatpush1.msra.mxu0 0.0
    %756 = vmatprep.subr.mxu0 0.0
    %757 = vmatpush1.msra.mxu0 0.0
    %758 = vmatprep.subr.mxu0 0.0
    %759 = vmatpush1.msra.mxu0 0.0
    %760 = vmatprep.subr.mxu0 0.0
    %761 = vmatpush1.msra.mxu0 0.0
    %762 = vmatprep.subr.mxu0 0.0
    %763 = vmatpush1.msra.mxu0 0.0
    %764 = vmatprep.subr.mxu0 0.0
    %765 = vmatpush1.msra.mxu0 0.0
    %766 = vmatprep.subr.mxu0 0.0
    %767 = vmatpush1.msra.mxu0 0.0
    %768 = vmatprep.subr.mxu0 0.0
    %769 = vmatpush1.msra.mxu0 0.0
    %770 = vmatprep.subr.mxu0 0.0
    %771 = vmatpush1.msra.mxu0 0.0
    %772 = vmatprep.subr.mxu0 0.0
    %773 = vmatpush1.msra.mxu0 0.0
    %774 = vmatprep.subr.mxu0 0.0
    %775 = vmatpush1.msra.mxu0 0.0
    %776 = vmatprep.subr.mxu0 0.0
    %777 = vmatpush1.msra.mxu0 0.0
    %778 = vmatprep.subr.mxu0 0.0
    %779 = vmatpush1.msra.mxu0 0.0
    %780 = vmatprep.subr.mxu0 0.0
    %781 = vmatpush1.msra.mxu0 0.0
    %782 = vmatprep.subr.mxu0 0.0
    %783 = vmatpush1.msra.mxu0 0.0
    %784 = vmatprep.subr.mxu0 0.0
    %785 = vmatpush1.msra.mxu0 0.0
    %786 = vmatprep.subr.mxu0 0.0
    %787 = vmatpush1.msra.mxu0 0.0
    %788 = vmatprep.mubr.f32.mxu0 0.0
    %789 = vmatmul.mubr.f32.gmra.mrb[0].mxu0 %v719
    %v790 = vpop.f32.mrb[0].mxu0
    %v791 = vadd.f32 %v706, %v790
    %v792 = vpop.f32.mrb[0].mxu0
    %793 = vmatprep.mubr.f32.mxu0 0.0
    %794 = vmatmul.mubr.f32.gmra.mrb[0].mxu0 %v722
    %v795 = vpop.f32.mrb[0].mxu0
    %v796 = vadd.f32 %v711, %v795
    %v797 = vpop.f32.mrb[0].mxu0
    %798 = vdwg.mxu0
    %799 = vrot.lane.b32.xlu0 %v180, 112
    %v800 = vpop.permute.xlu0 %799
    %801 = vrot.lane.b32.xlu0 %v181, 112
    %v802 = vpop.permute.xlu0 %801
    %803 = vrot.lane.b32.xlu0 %v172, 80
    %v804 = vpop.permute.xlu0 %803
    %805 = vrot.lane.b32.xlu0 %v177, 80
    %v806 = vpop.permute.xlu0 %805
    %v807 = vsel %vm233, %v800, 0
    %v809 = vsel %vm233, %v802, 0
    %v811 = vsel %vm233, %v804, 0
    %v813 = vsel %vm233, %v806, 0
    %815 = vmatprep.subr.mxu0 0.0
    %816 = vmatpush1.xpose.msra.mxu0 %v811
    %817 = vmatprep.subr.mxu0 0.0
    %818 = vmatpush1.xpose.msra.mxu0 %v813
    %819 = vmatprep.subr.mxu0 0.0
    %820 = vmatpush1.xpose.msra.mxu0 0.0
    %821 = vmatprep.subr.mxu0 0.0
    %822 = vmatpush1.xpose.msra.mxu0 0.0
    %823 = vmatprep.subr.mxu0 0.0
    %824 = vmatpush1.xpose.msra.mxu0 0.0
    %825 = vmatprep.subr.mxu0 0.0
    %826 = vmatpush1.xpose.msra.mxu0 0.0
    %827 = vmatprep.subr.mxu0 0.0
    %828 = vmatpush1.xpose.msra.mxu0 0.0
    %829 = vmatprep.subr.mxu0 0.0
    %830 = vmatpush1.xpose.msra.mxu0 0.0
    %831 = vmatprep.subr.mxu0 0.0
    %832 = vmatpush1.xpose.msra.mxu0 0.0
    %833 = vmatprep.subr.mxu0 0.0
    %834 = vmatpush1.xpose.msra.mxu0 0.0
    %835 = vmatprep.subr.mxu0 0.0
    %836 = vmatpush1.xpose.msra.mxu0 0.0
    %837 = vmatprep.subr.mxu0 0.0
    %838 = vmatpush1.xpose.msra.mxu0 0.0
    %839 = vmatprep.subr.mxu0 0.0
    %840 = vmatpush1.xpose.msra.mxu0 0.0
    %841 = vmatprep.subr.mxu0 0.0
    %842 = vmatpush1.xpose.msra.mxu0 0.0
    %843 = vmatprep.subr.mxu0 0.0
    %844 = vmatpush1.xpose.msra.mxu0 0.0
    %845 = vmatprep.subr.mxu0 0.0
    %846 = vmatpush1.xpose.msra.mxu0 0.0
    %847 = vmatprep.subr.mxu0 0.0
    %848 = vmatpush1.xpose.msra.mxu0 0.0
    %849 = vmatprep.subr.mxu0 0.0
    %850 = vmatpush1.xpose.msra.mxu0 0.0
    %851 = vmatprep.subr.mxu0 0.0
    %852 = vmatpush1.xpose.msra.mxu0 0.0
    %853 = vmatprep.subr.mxu0 0.0
    %854 = vmatpush1.xpose.msra.mxu0 0.0
    %855 = vmatprep.subr.mxu0 0.0
    %856 = vmatpush1.xpose.msra.mxu0 0.0
    %857 = vmatprep.subr.mxu0 0.0
    %858 = vmatpush1.xpose.msra.mxu0 0.0
    %859 = vmatprep.subr.mxu0 0.0
    %860 = vmatpush1.xpose.msra.mxu0 0.0
    %861 = vmatprep.subr.mxu0 0.0
    %862 = vmatpush1.xpose.msra.mxu0 0.0
    %863 = vmatprep.subr.mxu0 0.0
    %864 = vmatpush1.xpose.msra.mxu0 0.0
    %865 = vmatprep.subr.mxu0 0.0
    %866 = vmatpush1.xpose.msra.mxu0 0.0
    %867 = vmatprep.subr.mxu0 0.0
    %868 = vmatpush1.xpose.msra.mxu0 0.0
    %869 = vmatprep.subr.mxu0 0.0
    %870 = vmatpush1.xpose.msra.mxu0 0.0
    %871 = vmatprep.subr.mxu0 0.0
    %872 = vmatpush1.xpose.msra.mxu0 0.0
    %873 = vmatprep.subr.mxu0 0.0
    %874 = vmatpush1.xpose.msra.mxu0 0.0
    %875 = vmatprep.subr.mxu0 0.0
    %876 = vmatpush1.xpose.msra.mxu0 0.0
    %877 = vmatprep.subr.mxu0 0.0
    %878 = vmatpush1.xpose.msra.mxu0 0.0
    %879 = vmatprep.mubr.f32.mxu0 0.0
    %880 = vmatmul.mubr.f32.gmra.mrb[0].mxu0 %v807
    %v881 = vpop.f32.mrb[0].mxu0
    %v882 = vadd.f32 %v225, %v881
    %v883 = vpop.f32.mrb[0].mxu0
    %884 = vmatprep.mubr.f32.mxu0 0.0
    %885 = vmatmul.mubr.f32.gmra.mrb[0].mxu0 %v809
    %v886 = vpop.f32.mrb[0].mxu0
    %v887 = vadd.f32 %v226, %v886
    %v888 = vpop.f32.mrb[0].mxu0
    %889 = vdwg.mxu0
    %v890 = vsel %vm319, %v882, -inf
    %891 = vmax.xlane.f32.xlu0 %v890
    %v892 = vpop.xlane.xlu0 %891
    %v893 = vsel %vm319, %v887, -inf
    %894 = vmax.xlane.f32.xlu0 %v893
    %v895 = vpop.xlane.xlu0 %894
    %v896 = vsub.f32 %v882, %v892
    %v897 = vsub.f32 %v887, %v895
    %v898 = vmul.f32 %v896, 1.442695
    %v899 = vpow.pop %v898
    %v900 = vmul.f32 %v897, 1.442695
    %v901 = vpow.pop %v900
    %v902 = vsel %vm319, %v899, 0.0
    %903 = vadd.xlane.f32.xlu0 %v902
    %v904 = vpop.xlane.xlu0 %903
    %v905 = vsel %vm319, %v901, 0.0
    %906 = vadd.xlane.f32.xlu0 %v905
    %v907 = vpop.xlane.xlu0 %906
    %v908 = vrcp.pop %v904
    %v909 = vmul.f32 %v899, %v908
    %v910 = vrcp.pop %v907
    %v911 = vmul.f32 %v901, %v910
    %912 = vrot.lane.b32.xlu0 %v172, 48
    %v913 = vpop.permute.xlu0 %912
    %914 = vrot.lane.b32.xlu0 %v177, 48
    %v915 = vpop.permute.xlu0 %914
    %v919 = vsel %vm319, %v909, 0
    %v922 = vsel %vm319, %v911, 0
    %924 = vmatprep.subr.mxu0 0.0
    %925 = vmatpush1.msra.mxu0 %v913
    %926 = vmatprep.subr.mxu0 0.0
    %927 = vmatpush1.msra.mxu0 %v915
    %928 = vmatprep.subr.mxu0 0.0
    %929 = vmatpush1.msra.mxu0 0.0
    %930 = vmatprep.subr.mxu0 0.0
    %931 = vmatpush1.msra.mxu0 0.0
    %932 = vmatprep.subr.mxu0 0.0
    %933 = vmatpush1.msra.mxu0 0.0
    %934 = vmatprep.subr.mxu0 0.0
    %935 = vmatpush1.msra.mxu0 0.0
    %936 = vmatprep.subr.mxu0 0.0
    %937 = vmatpush1.msra.mxu0 0.0
    %938 = vmatprep.subr.mxu0 0.0
    %939 = vmatpush1.msra.mxu0 0.0
    %940 = vmatprep.subr.mxu0 0.0
    %941 = vmatpush1.msra.mxu0 0.0
    %942 = vmatprep.subr.mxu0 0.0
    %943 = vmatpush1.msra.mxu0 0.0
    %944 = vmatprep.subr.mxu0 0.0
    %945 = vmatpush1.msra.mxu0 0.0
    %946 = vmatprep.subr.mxu0 0.0
    %947 = vmatpush1.msra.mxu0 0.0
    %948 = vmatprep.subr.mxu0 0.0
    %949 = vmatpush1.msra.mxu0 0.0
    %950 = vmatprep.subr.mxu0 0.0
    %951 = vmatpush1.msra.mxu0 0.0
    %952 = vmatprep.subr.mxu0 0.0
    %953 = vmatpush1.msra.mxu0 0.0
    %954 = vmatprep.subr.mxu0 0.0
    %955 = vmatpush1.msra.mxu0 0.0
    %956 = vmatprep.subr.mxu0 0.0
    %957 = vmatpush1.msra.mxu0 0.0
    %958 = vmatprep.subr.mxu0 0.0
    %959 = vmatpush1.msra.mxu0 0.0
    %960 = vmatprep.subr.mxu0 0.0
    %961 = vmatpush1.msra.mxu0 0.0
    %962 = vmatprep.subr.mxu0 0.0
    %963 = vmatpush1.msra.mxu0 0.0
    %964 = vmatprep.subr.mxu0 0.0
    %965 = vmatpush1.msra.mxu0 0.0
    %966 = vmatprep.subr.mxu0 0.0
    %967 = vmatpush1.msra.mxu0 0.0
    %968 = vmatprep.subr.mxu0 0.0
    %969 = vmatpush1.msra.mxu0 0.0
    %970 = vmatprep.subr.mxu0 0.0
    %971 = vmatpush1.msra.mxu0 0.0
    %972 = vmatprep.subr.mxu0 0.0
    %973 = vmatpush1.msra.mxu0 0.0
    %974 = vmatprep.subr.mxu0 0.0
    %975 = vmatpush1.msra.mxu0 0.0
    %976 = vmatprep.subr.mxu0 0.0
    %977 = vmatpush1.msra.mxu0 0.0
    %978 = vmatprep.subr.mxu0 0.0
    %979 = vmatpush1.msra.mxu0 0.0
    %980 = vmatprep.subr.mxu0 0.0
    %981 = vmatpush1.msra.mxu0 0.0
    %982 = vmatprep.subr.mxu0 0.0
    %983 = vmatpush1.msra.mxu0 0.0
    %984 = vmatprep.subr.mxu0 0.0
    %985 = vmatpush1.msra.mxu0 0.0
    %986 = vmatprep.subr.mxu0 0.0
    %987 = vmatpush1.msra.mxu0 0.0
    %988 = vmatprep.mubr.f32.mxu0 0.0
    %989 = vmatmul.mubr.f32.gmra.mrb[0].mxu0 %v919
    %v990 = vpop.f32.mrb[0].mxu0
    %v991 = vadd.f32 0.0, %v990
    %v992 = vpop.f32.mrb[0].mxu0
    %993 = vmatprep.mubr.f32.mxu0 0.0
    %994 = vmatmul.mubr.f32.gmra.mrb[0].mxu0 %v922
    %v995 = vpop.f32.mrb[0].mxu0
    %v996 = vadd.f32 0.0, %v995
    %v997 = vpop.f32.mrb[0].mxu0
    %998 = vdwg.mxu0
    %1000 = vrot.lane.b32.xlu0 %v44, 32
    %v1001 = vpop.permute.xlu0 %1000
    %v1004 = vsel %vm233, %v991, 0
    %v1007 = vsel %vm233, %v996, 0
    %1009 = vmatprep.subr.mxu0 0.0
    %1010 = vmatpush1.msra.mxu0 %v1001
    %1011 = vmatprep.subr.mxu0 0.0
    %1012 = vmatpush1.msra.mxu0 0.0
    %1013 = vmatprep.subr.mxu0 0.0
    %1014 = vmatpush1.msra.mxu0 0.0
    %1015 = vmatprep.subr.mxu0 0.0
    %1016 = vmatpush1.msra.mxu0 0.0
    %1017 = vmatprep.subr.mxu0 0.0
    %1018 = vmatpush1.msra.mxu0 0.0
    %1019 = vmatprep.subr.mxu0 0.0
    %1020 = vmatpush1.msra.mxu0 0.0
    %1021 = vmatprep.subr.mxu0 0.0
    %1022 = vmatpush1.msra.mxu0 0.0
    %1023 = vmatprep.subr.mxu0 0.0
    %1024 = vmatpush1.msra.mxu0 0.0
    %1025 = vmatprep.subr.mxu0 0.0
    %1026 = vmatpush1.msra.mxu0 0.0
    %1027 = vmatprep.subr.mxu0 0.0
    %1028 = vmatpush1.msra.mxu0 0.0
    %1029 = vmatprep.subr.mxu0 0.0
    %1030 = vmatpush1.msra.mxu0 0.0
    %1031 = vmatprep.subr.mxu0 0.0
    %1032 = vmatpush1.msra.mxu0 0.0
    %1033 = vmatprep.subr.mxu0 0.0
    %1034 = vmatpush1.msra.mxu0 0.0
    %1035 = vmatprep.subr.mxu0 0.0
    %1036 = vmatpush1.msra.mxu0 0.0
    %1037 = vmatprep.subr.mxu0 0.0
    %1038 = vmatpush1.msra.mxu0 0.0
    %1039 = vmatprep.subr.mxu0 0.0
    %1040 = vmatpush1.msra.mxu0 0.0
    %1041 = vmatprep.subr.mxu0 0.0
    %1042 = vmatpush1.msra.mxu0 0.0
    %1043 = vmatprep.subr.mxu0 0.0
    %1044 = vmatpush1.msra.mxu0 0.0
    %1045 = vmatprep.subr.mxu0 0.0
    %1046 = vmatpush1.msra.mxu0 0.0
    %1047 = vmatprep.subr.mxu0 0.0
    %1048 = vmatpush1.msra.mxu0 0.0
    %1049 = vmatprep.subr.mxu0 0.0
    %1050 = vmatpush1.msra.mxu0 0.0
    %1051 = vmatprep.subr.mxu0 0.0
    %1052 = vmatpush1.msra.mxu0 0.0
    %1053 = vmatprep.subr.mxu0 0.0
    %1054 = vmatpush1.msra.mxu0 0.0
    %1055 = vmatprep.subr.mxu0 0.0
    %1056 = vmatpush1.msra.mxu0 0.0
    %1057 = vmatprep.subr.mxu0 0.0
    %1058 = vmatpush1.msra.mxu0 0.0
    %1059 = vmatprep.subr.mxu0 0.0
    %1060 = vmatpush1.msra.mxu0 0.0
    %1061 = vmatprep.subr.mxu0 0.0
    %1062 = vmatpush1.msra.mxu0 0.0
    %1063 = vmatprep.subr.mxu0 0.0
    %1064 = vmatpush1.msra.mxu0 0.0
    %1065 = vmatprep.subr.mxu0 0.0
    %1066 = vmatpush1.msra.mxu0 0.0
    %1067 = vmatprep.subr.mxu0 0.0
    %1068 = vmatpush1.msra.mxu0 0.0
    %1069 = vmatprep.subr.mxu0 0.0
    %1070 = vmatpush1.msra.mxu0 0.0
    %1071 = vmatprep.subr.mxu0 0.0
    %1072 = vmatpush1.msra.mxu0 0.0
    %1073 = vmatprep.mubr.f32.mxu0 0.0
    %1074 = vmatmul.mubr.f32.gmra.mrb[0].mxu0 %v1004
    %v1075 = vpop.f32.mrb[0].mxu0
    %v1076 = vadd.f32 0.0, %v1075
    %v1077 = vpop.f32.mrb[0].mxu0
    %1078 = vmatprep.mubr.f32.mxu0 0.0
    %1079 = vmatmul.mubr.f32.gmra.mrb[0].mxu0 %v1007
    %v1080 = vpop.f32.mrb[0].mxu0
    %v1081 = vadd.f32 0.0, %v1080
    %v1082 = vpop.f32.mrb[0].mxu0
    %1083 = vdwg.mxu0
    %v1084 = vadd.f32 %v791, %v1076
    %v1085 = vadd.f32 %v796, %v1081
    %1086 = vrot.lane.b32.xlu0 %v180, 104
    %v1087 = vpop.permute.xlu0 %1086
    %1088 = vrot.lane.b32.xlu0 %v181, 104
    %v1089 = vpop.permute.xlu0 %1088
    %1090 = vrot.lane.b32.xlu0 %v172, 72
    %v1091 = vpop.permute.xlu0 %1090
    %1092 = vrot.lane.b32.xlu0 %v177, 72
    %v1093 = vpop.permute.xlu0 %1092
    %v1094 = vsel %vm233, %v1087, 0
    %v1096 = vsel %vm233, %v1089, 0
    %v1098 = vsel %vm233, %v1091, 0
    %v1100 = vsel %vm233, %v1093, 0
    %1102 = vmatprep.subr.mxu0 0.0
    %1103 = vmatpush1.xpose.msra.mxu0 %v1098
    %1104 = vmatprep.subr.mxu0 0.0
    %1105 = vmatpush1.xpose.msra.mxu0 %v1100
    %1106 = vmatprep.subr.mxu0 0.0
    %1107 = vmatpush1.xpose.msra.mxu0 0.0
    %1108 = vmatprep.subr.mxu0 0.0
    %1109 = vmatpush1.xpose.msra.mxu0 0.0
    %1110 = vmatprep.subr.mxu0 0.0
    %1111 = vmatpush1.xpose.msra.mxu0 0.0
    %1112 = vmatprep.subr.mxu0 0.0
    %1113 = vmatpush1.xpose.msra.mxu0 0.0
    %1114 = vmatprep.subr.mxu0 0.0
    %1115 = vmatpush1.xpose.msra.mxu0 0.0
    %1116 = vmatprep.subr.mxu0 0.0
    %1117 = vmatpush1.xpose.msra.mxu0 0.0
    %1118 = vmatprep.subr.mxu0 0.0
    %1119 = vmatpush1.xpose.msra.mxu0 0.0
    %1120 = vmatprep.subr.mxu0 0.0
    %1121 = vmatpush1.xpose.msra.mxu0 0.0
    %1122 = vmatprep.subr.mxu0 0.0
    %1123 = vmatpush1.xpose.msra.mxu0 0.0
    %1124 = vmatprep.subr.mxu0 0.0
    %1125 = vmatpush1.xpose.msra.mxu0 0.0
    %1126 = vmatprep.subr.mxu0 0.0
    %1127 = vmatpush1.xpose.msra.mxu0 0.0
    %1128 = vmatprep.subr.mxu0 0.0
    %1129 = vmatpush1.xpose.msra.mxu0 0.0
    %1130 = vmatprep.subr.mxu0 0.0
    %1131 = vmatpush1.xpose.msra.mxu0 0.0
    %1132 = vmatprep.subr.mxu0 0.0
    %1133 = vmatpush1.xpose.msra.mxu0 0.0
    %1134 = vmatprep.subr.mxu0 0.0
    %1135 = vmatpush1.xpose.msra.mxu0 0.0
    %1136 = vmatprep.subr.mxu0 0.0
    %1137 = vmatpush1.xpose.msra.mxu0 0.0
    %1138 = vmatprep.subr.mxu0 0.0
    %1139 = vmatpush1.xpose.msra.mxu0 0.0
    %1140 = vmatprep.subr.mxu0 0.0
    %1141 = vmatpush1.xpose.msra.mxu0 0.0
    %1142 = vmatprep.subr.mxu0 0.0
    %1143 = vmatpush1.xpose.msra.mxu0 0.0
    %1144 = vmatprep.subr.mxu0 0.0
    %1145 = vmatpush1.xpose.msra.mxu0 0.0
    %1146 = vmatprep.subr.mxu0 0.0
    %1147 = vmatpush1.xpose.msra.mxu0 0.0
    %1148 = vmatprep.subr.mxu0 0.0
    %1149 = vmatpush1.xpose.msra.mxu0 0.0
    %1150 = vmatprep.subr.mxu0 0.0
    %1151 = vmatpush1.xpose.msra.mxu0 0.0
    %1152 = vmatprep.subr.mxu0 0.0
    %1153 = vmatpush1.xpose.msra.mxu0 0.0
    %1154 = vmatprep.subr.mxu0 0.0
    %1155 = vmatpush1.xpose.msra.mxu0 0.0
    %1156 = vmatprep.subr.mxu0 0.0
    %1157 = vmatpush1.xpose.msra.mxu0 0.0
    %1158 = vmatprep.subr.mxu0 0.0
    %1159 = vmatpush1.xpose.msra.mxu0 0.0
    %1160 = vmatprep.subr.mxu0 0.0
    %1161 = vmatpush1.xpose.msra.mxu0 0.0
    %1162 = vmatprep.subr.mxu0 0.0
    %1163 = vmatpush1.xpose.msra.mxu0 0.0
    %1164 = vmatprep.subr.mxu0 0.0
    %1165 = vmatpush1.xpose.msra.mxu0 0.0
    %1166 = vmatprep.mubr.f32.mxu0 0.0
    %1167 = vmatmul.mubr.f32.gmra.mrb[0].mxu0 %v1094
    %v1168 = vpop.f32.mrb[0].mxu0
    %v1169 = vadd.f32 %v225, %v1168
    %v1170 = vpop.f32.mrb[0].mxu0
    %1171 = vmatprep.mubr.f32.mxu0 0.0
    %1172 = vmatmul.mubr.f32.gmra.mrb[0].mxu0 %v1096
    %v1173 = vpop.f32.mrb[0].mxu0
    %v1174 = vadd.f32 %v226, %v1173
    %v1175 = vpop.f32.mrb[0].mxu0
    %1176 = vdwg.mxu0
    %v1177 = vsel %vm319, %v1169, -inf
    %1178 = vmax.xlane.f32.xlu0 %v1177
    %v1179 = vpop.xlane.xlu0 %1178
    %v1180 = vsel %vm319, %v1174, -inf
    %1181 = vmax.xlane.f32.xlu0 %v1180
    %v1182 = vpop.xlane.xlu0 %1181
    %v1183 = vsub.f32 %v1169, %v1179
    %v1184 = vsub.f32 %v1174, %v1182
    %v1185 = vmul.f32 %v1183, 1.442695
    %v1186 = vpow.pop %v1185
    %v1187 = vmul.f32 %v1184, 1.442695
    %v1188 = vpow.pop %v1187
    %v1189 = vsel %vm319, %v1186, 0.0
    %1190 = vadd.xlane.f32.xlu0 %v1189
    %v1191 = vpop.xlane.xlu0 %1190
    %v1192 = vsel %vm319, %v1188, 0.0
    %1193 = vadd.xlane.f32.xlu0 %v1192
    %v1194 = vpop.xlane.xlu0 %1193
    %v1195 = vrcp.pop %v1191
    %v1196 = vmul.f32 %v1186, %v1195
    %v1197 = vrcp.pop %v1194
    %v1198 = vmul.f32 %v1188, %v1197
    %1199 = vrot.lane.b32.xlu0 %v172, 40
    %v1200 = vpop.permute.xlu0 %1199
    %1201 = vrot.lane.b32.xlu0 %v177, 40
    %v1202 = vpop.permute.xlu0 %1201
    %v1206 = vsel %vm319, %v1196, 0
    %v1209 = vsel %vm319, %v1198, 0
    %1211 = vmatprep.subr.mxu0 0.0
    %1212 = vmatpush1.msra.mxu0 %v1200
    %1213 = vmatprep.subr.mxu0 0.0
    %1214 = vmatpush1.msra.mxu0 %v1202
    %1215 = vmatprep.subr.mxu0 0.0
    %1216 = vmatpush1.msra.mxu0 0.0
    %1217 = vmatprep.subr.mxu0 0.0
    %1218 = vmatpush1.msra.mxu0 0.0
    %1219 = vmatprep.subr.mxu0 0.0
    %1220 = vmatpush1.msra.mxu0 0.0
    %1221 = vmatprep.subr.mxu0 0.0
    %1222 = vmatpush1.msra.mxu0 0.0
    %1223 = vmatprep.subr.mxu0 0.0
    %1224 = vmatpush1.msra.mxu0 0.0
    %1225 = vmatprep.subr.mxu0 0.0
    %1226 = vmatpush1.msra.mxu0 0.0
    %1227 = vmatprep.subr.mxu0 0.0
    %1228 = vmatpush1.msra.mxu0 0.0
    %1229 = vmatprep.subr.mxu0 0.0
    %1230 = vmatpush1.msra.mxu0 0.0
    %1231 = vmatprep.subr.mxu0 0.0
    %1232 = vmatpush1.msra.mxu0 0.0
    %1233 = vmatprep.subr.mxu0 0.0
    %1234 = vmatpush1.msra.mxu0 0.0
    %1235 = vmatprep.subr.mxu0 0.0
    %1236 = vmatpush1.msra.mxu0 0.0
    %1237 = vmatprep.subr.mxu0 0.0
    %1238 = vmatpush1.msra.mxu0 0.0
    %1239 = vmatprep.subr.mxu0 0.0
    %1240 = vmatpush1.msra.mxu0 0.0
    %1241 = vmatprep.subr.mxu0 0.0
    %1242 = vmatpush1.msra.mxu0 0.0
    %1243 = vmatprep.subr.mxu0 0.0
    %1244 = vmatpush1.msra.mxu0 0.0
    %1245 = vmatprep.subr.mxu0 0.0
    %1246 = vmatpush1.msra.mxu0 0.0
    %1247 = vmatprep.subr.mxu0 0.0
    %1248 = vmatpush1.msra.mxu0 0.0
    %1249 = vmatprep.subr.mxu0 0.0
    %1250 = vmatpush1.msra.mxu0 0.0
    %1251 = vmatprep.subr.mxu0 0.0
    %1252 = vmatpush1.msra.mxu0 0.0
    %1253 = vmatprep.subr.mxu0 0.0
    %1254 = vmatpush1.msra.mxu0 0.0
    %1255 = vmatprep.subr.mxu0 0.0
    %1256 = vmatpush1.msra.mxu0 0.0
    %1257 = vmatprep.subr.mxu0 0.0
    %1258 = vmatpush1.msra.mxu0 0.0
    %1259 = vmatprep.subr.mxu0 0.0
    %1260 = vmatpush1.msra.mxu0 0.0
    %1261 = vmatprep.subr.mxu0 0.0
    %1262 = vmatpush1.msra.mxu0 0.0
    %1263 = vmatprep.subr.mxu0 0.0
    %1264 = vmatpush1.msra.mxu0 0.0
    %1265 = vmatprep.subr.mxu0 0.0
    %1266 = vmatpush1.msra.mxu0 0.0
    %1267 = vmatprep.subr.mxu0 0.0
    %1268 = vmatpush1.msra.mxu0 0.0
    %1269 = vmatprep.subr.mxu0 0.0
    %1270 = vmatpush1.msra.mxu0 0.0
    %1271 = vmatprep.subr.mxu0 0.0
    %1272 = vmatpush1.msra.mxu0 0.0
    %1273 = vmatprep.subr.mxu0 0.0
    %1274 = vmatpush1.msra.mxu0 0.0
    %1275 = vmatprep.mubr.f32.mxu0 0.0
    %1276 = vmatmul.mubr.f32.gmra.mrb[0].mxu0 %v1206
    %v1277 = vpop.f32.mrb[0].mxu0
    %v1278 = vadd.f32 0.0, %v1277
    %v1279 = vpop.f32.mrb[0].mxu0
    %1280 = vmatprep.mubr.f32.mxu0 0.0
    %1281 = vmatmul.mubr.f32.gmra.mrb[0].mxu0 %v1209
    %v1282 = vpop.f32.mrb[0].mxu0
    %v1283 = vadd.f32 0.0, %v1282
    %v1284 = vpop.f32.mrb[0].mxu0
    %1285 = vdwg.mxu0
    %1287 = vrot.lane.b32.xlu0 %v45, 32
    %v1288 = vpop.permute.xlu0 %1287
    %v1291 = vsel %vm233, %v1278, 0
    %v1294 = vsel %vm233, %v1283, 0
    %1296 = vmatprep.subr.mxu0 0.0
    %1297 = vmatpush1.msra.mxu0 %v1288
    %1298 = vmatprep.subr.mxu0 0.0
    %1299 = vmatpush1.msra.mxu0 0.0
    %1300 = vmatprep.subr.mxu0 0.0
    %1301 = vmatpush1.msra.mxu0 0.0
    %1302 = vmatprep.subr.mxu0 0.0
    %1303 = vmatpush1.msra.mxu0 0.0
    %1304 = vmatprep.subr.mxu0 0.0
    %1305 = vmatpush1.msra.mxu0 0.0
    %1306 = vmatprep.subr.mxu0 0.0
    %1307 = vmatpush1.msra.mxu0 0.0
    %1308 = vmatprep.subr.mxu0 0.0
    %1309 = vmatpush1.msra.mxu0 0.0
    %1310 = vmatprep.subr.mxu0 0.0
    %1311 = vmatpush1.msra.mxu0 0.0
    %1312 = vmatprep.subr.mxu0 0.0
    %1313 = vmatpush1.msra.mxu0 0.0
    %1314 = vmatprep.subr.mxu0 0.0
    %1315 = vmatpush1.msra.mxu0 0.0
    %1316 = vmatprep.subr.mxu0 0.0
    %1317 = vmatpush1.msra.mxu0 0.0
    %1318 = vmatprep.subr.mxu0 0.0
    %1319 = vmatpush1.msra.mxu0 0.0
    %1320 = vmatprep.subr.mxu0 0.0
    %1321 = vmatpush1.msra.mxu0 0.0
    %1322 = vmatprep.subr.mxu0 0.0
    %1323 = vmatpush1.msra.mxu0 0.0
    %1324 = vmatprep.subr.mxu0 0.0
    %1325 = vmatpush1.msra.mxu0 0.0
    %1326 = vmatprep.subr.mxu0 0.0
    %1327 = vmatpush1.msra.mxu0 0.0
    %1328 = vmatprep.subr.mxu0 0.0
    %1329 = vmatpush1.msra.mxu0 0.0
    %1330 = vmatprep.subr.mxu0 0.0
    %1331 = vmatpush1.msra.mxu0 0.0
    %1332 = vmatprep.subr.mxu0 0.0
    %1333 = vmatpush1.msra.mxu0 0.0
    %1334 = vmatprep.subr.mxu0 0.0
    %1335 = vmatpush1.msra.mxu0 0.0
    %1336 = vmatprep.subr.mxu0 0.0
    %1337 = vmatpush1.msra.mxu0 0.0
    %1338 = vmatprep.subr.mxu0 0.0
    %1339 = vmatpush1.msra.mxu0 0.0
    %1340 = vmatprep.subr.mxu0 0.0
    %1341 = vmatpush1.msra.mxu0 0.0
    %1342 = vmatprep.subr.mxu0 0.0
    %1343 = vmatpush1.msra.mxu0 0.0
    %1344 = vmatprep.subr.mxu0 0.0
    %1345 = vmatpush1.msra.mxu0 0.0
    %1346 = vmatprep.subr.mxu0 0.0
    %1347 = vmatpush1.msra.mxu0 0.0
    %1348 = vmatprep.subr.mxu0 0.0
    %1349 = vmatpush1.msra.mxu0 0.0
    %1350 = vmatprep.subr.mxu0 0.0
    %1351 = vmatpush1.msra.mxu0 0.0
    %1352 = vmatprep.subr.mxu0 0.0
    %1353 = vmatpush1.msra.mxu0 0.0
    %1354 = vmatprep.subr.mxu0 0.0
    %1355 = vmatpush1.msra.mxu0 0.0
    %1356 = vmatprep.subr.mxu0 0.0
    %1357 = vmatpush1.msra.mxu0 0.0
    %1358 = vmatprep.subr.mxu0 0.0
    %1359 = vmatpush1.msra.mxu0 0.0
    %1360 = vmatprep.mubr.f32.mxu0 0.0
    %1361 = vmatmul.mubr.f32.gmra.mrb[0].mxu0 %v1291
    %v1362 = vpop.f32.mrb[0].mxu0
    %v1363 = vadd.f32 0.0, %v1362
    %v1364 = vpop.f32.mrb[0].mxu0
    %1365 = vmatprep.mubr.f32.mxu0 0.0
    %1366 = vmatmul.mubr.f32.gmra.mrb[0].mxu0 %v1294
    %v1367 = vpop.f32.mrb[0].mxu0
    %v1368 = vadd.f32 0.0, %v1367
    %v1369 = vpop.f32.mrb[0].mxu0
    %1370 = vdwg.mxu0
    %v1371 = vadd.f32 %v1084, %v1363
    %v1372 = vadd.f32 %v1085, %v1368
    %v1373 = vadd.f32 %v40, %v1371
    %v1374 = vadd.f32 %v41, %v1372
    %v1375 = vlaneseq
    %v1376 = vshrl.u32 %v1375, 7
    %v1377 = vsub.s32 5, %v1376
    %v1378 = vrot.slane %v54, %v1377
    %v1379 = vadd.f32 %v1373, %v1378
    %v1380 = vadd.f32 %v1374, %v1378
    %v1381 = vsel %vm55, %v1379, 0.0
    %1382 = vadd.xlane.f32.xlu0 %v1381
    %v1383 = vpop.xlane.xlu0 %1382
    %v1384 = vsel %vm55, %v1380, 0.0
    %1385 = vadd.xlane.f32.xlu0 %v1384
    %v1386 = vpop.xlane.xlu0 %1385
    %v1387 = vmul.f32 %v1383, %v62
    %v1388 = vmul.f32 %v1386, %v62
    %v1389 = vsub.f32 %v1379, %v1387
    %v1390 = vsub.f32 %v1380, %v1388
    %v1391 = vmul.f32 %v1389, %v1389
    %v1392 = vmul.f32 %v1390, %v1390
    %v1393 = vsel %vm55, %v1391, 0.0
    %1394 = vadd.xlane.f32.xlu0 %v1393
    %v1395 = vpop.xlane.xlu0 %1394
    %v1396 = vsel %vm55, %v1392, 0.0
    %1397 = vadd.xlane.f32.xlu0 %v1396
    %v1398 = vpop.xlane.xlu0 %1397
    %v1399 = vmul.f32 %v1395, %v62
    %v1400 = vmul.f32 %v1398, %v62
    %v1401 = vadd.f32 %v1399, 1e-05
    %v1402 = vadd.f32 %v1400, 1e-05
    %v1403 = vrsqrt.pop %v1401
    %v1404 = vrsqrt.pop %v1402
    %v1405 = vmul.f32 %v1389, %v1403
    %v1406 = vmul.f32 %v1390, %v1404
    %v1407 = vlaneseq
    %v1408 = vshrl.u32 %v1407, 7
    %v1409 = vsub.s32 2, %v1408
    %v1410 = vrot.slane %v54, %v1409
    %v1411 = vmul.f32 %v1405, %v1410
    %v1412 = vmul.f32 %v1406, %v1410
    %v1413 = vlaneseq
    %v1414 = vshrl.u32 %v1413, 7
    %v1415 = vsub.s32 3, %v1414
    %v1416 = vrot.slane %v54, %v1415
    %v1417 = vadd.f32 %v1411, %v1416
    %v1418 = vadd.f32 %v1412, %v1416
    %v1419 = vlaneseq
    %v1420 = vshrl.u32 %v1419, 7
    %v1421 = vsub.s32 6, %v1420
    %v1422 = vrot.slane %v54, %v1421
    %v1424 = vsel %vm55, %v1417, 0
    %v1427 = vsel %vm55, %v1418, 0
    %1429 = vmatprep.subr.mxu0 0.0
    %1430 = vmatpush1.msra.mxu0 %v46
    %1431 = vmatprep.subr.mxu0 0.0
    %1432 = vmatpush1.msra.mxu0 %v47
    %1433 = vmatprep.subr.mxu0 0.0
    %1434 = vmatpush1.msra.mxu0 %v48
    %1435 = vmatprep.subr.mxu0 0.0
    %1436 = vmatpush1.msra.mxu0 %v49
    %1437 = vmatprep.subr.mxu0 0.0
    %1438 = vmatpush1.msra.mxu0 0.0
    %1439 = vmatprep.subr.mxu0 0.0
    %1440 = vmatpush1.msra.mxu0 0.0
    %1441 = vmatprep.subr.mxu0 0.0
    %1442 = vmatpush1.msra.mxu0 0.0
    %1443 = vmatprep.subr.mxu0 0.0
    %1444 = vmatpush1.msra.mxu0 0.0
    %1445 = vmatprep.subr.mxu0 0.0
    %1446 = vmatpush1.msra.mxu0 0.0
    %1447 = vmatprep.subr.mxu0 0.0
    %1448 = vmatpush1.msra.mxu0 0.0
    %1449 = vmatprep.subr.mxu0 0.0
    %1450 = vmatpush1.msra.mxu0 0.0
    %1451 = vmatprep.subr.mxu0 0.0
    %1452 = vmatpush1.msra.mxu0 0.0
    %1453 = vmatprep.subr.mxu0 0.0
    %1454 = vmatpush1.msra.mxu0 0.0
    %1455 = vmatprep.subr.mxu0 0.0
    %1456 = vmatpush1.msra.mxu0 0.0
    %1457 = vmatprep.subr.mxu0 0.0
    %1458 = vmatpush1.msra.mxu0 0.0
    %1459 = vmatprep.subr.mxu0 0.0
    %1460 = vmatpush1.msra.mxu0 0.0
    %1461 = vmatprep.subr.mxu0 0.0
    %1462 = vmatpush1.msra.mxu0 0.0
    %1463 = vmatprep.subr.mxu0 0.0
    %1464 = vmatpush1.msra.mxu0 0.0
    %1465 = vmatprep.subr.mxu0 0.0
    %1466 = vmatpush1.msra.mxu0 0.0
    %1467 = vmatprep.subr.mxu0 0.0
    %1468 = vmatpush1.msra.mxu0 0.0
    %1469 = vmatprep.subr.mxu0 0.0
    %1470 = vmatpush1.msra.mxu0 0.0
    %1471 = vmatprep.subr.mxu0 0.0
    %1472 = vmatpush1.msra.mxu0 0.0
    %1473 = vmatprep.subr.mxu0 0.0
    %1474 = vmatpush1.msra.mxu0 0.0
    %1475 = vmatprep.subr.mxu0 0.0
    %1476 = vmatpush1.msra.mxu0 0.0
    %1477 = vmatprep.subr.mxu0 0.0
    %1478 = vmatpush1.msra.mxu0 0.0
    %1479 = vmatprep.subr.mxu0 0.0
    %1480 = vmatpush1.msra.mxu0 0.0
    %1481 = vmatprep.subr.mxu0 0.0
    %1482 = vmatpush1.msra.mxu0 0.0
    %1483 = vmatprep.subr.mxu0 0.0
    %1484 = vmatpush1.msra.mxu0 0.0
    %1485 = vmatprep.subr.mxu0 0.0
    %1486 = vmatpush1.msra.mxu0 0.0
    %1487 = vmatprep.subr.mxu0 0.0
    %1488 = vmatpush1.msra.mxu0 0.0
    %1489 = vmatprep.subr.mxu0 0.0
    %1490 = vmatpush1.msra.mxu0 0.0
    %1491 = vmatprep.subr.mxu0 0.0
    %1492 = vmatpush1.msra.mxu0 0.0
    %1493 = vmatprep.mubr.f32.mxu0 0.0
    %1494 = vmatmul.mubr.f32.gmra.mrb[0].mxu0 %v1424
    %v1495 = vpop.f32.mrb[0].mxu0
    %v1496 = vadd.f32 %v1422, %v1495
    %v1497 = vpop.f32.mrb[0].mxu0
    %1498 = vmatprep.mubr.f32.mxu0 0.0
    %1499 = vmatmul.mubr.f32.gmra.mrb[0].mxu0 %v1427
    %v1500 = vpop.f32.mrb[0].mxu0
    %v1501 = vadd.f32 %v1422, %v1500
    %v1502 = vpop.f32.mrb[0].mxu0
    %1503 = vdwg.mxu0
    %v1504 = vmul.f32 %v1496, 1.702
    %v1505 = vmul.f32 %v1501, 1.702
    %v1506 = vxor.u32 %v1504, 2147483648
    %v1507 = vxor.u32 %v1505, 2147483648
    %v1508 = vmul.f32 %v1506, 1.442695
    %v1509 = vpow.pop %v1508
    %v1510 = vmul.f32 %v1507, 1.442695
    %v1511 = vpow.pop %v1510
    %v1512 = vadd.f32 %v1509, 1.0
    %v1513 = vadd.f32 %v1511, 1.0
    %v1514 = vrcp.pop %v1512
    %v1515 = vmul.f32 1.0, %v1514
    %v1516 = vrcp.pop %v1513
    %v1517 = vmul.f32 1.0, %v1516
    %v1518 = vmul.f32 %v1496, %v1515
    %v1519 = vmul.f32 %v1501, %v1517
    %1522 = vrot.lane.b32.xlu0 %v1518, 96
    %v1523 = vpop.permute.xlu0 %1522
    %1524 = vrot.lane.b32.xlu0 %v1519, 96
    %v1525 = vpop.permute.xlu0 %1524
    %1530 = vrot.lane.b32.xlu0 %v50, 96
    %v1531 = vpop.permute.xlu0 %1530
    %1532 = vrot.lane.b32.xlu0 %v51, 96
    %v1533 = vpop.permute.xlu0 %1532
    %1534 = vrot.lane.b32.xlu0 %v52, 96
    %v1535 = vpop.permute.xlu0 %1534
    %1536 = vrot.lane.b32.xlu0 %v53, 96
    %v1537 = vpop.permute.xlu0 %1536
    %v1542 = vsel %vm55, %v1523, 0
    %v1544 = vsel %vm55, %v1525, 0
    %1546 = vmatprep.subr.mxu0 0.0
    %1547 = vmatpush1.msra.mxu0 %v1531
    %1548 = vmatprep.subr.mxu0 0.0
    %1549 = vmatpush1.msra.mxu0 %v1533
    %1550 = vmatprep.subr.mxu0 0.0
    %1551 = vmatpush1.msra.mxu0 %v1535
    %1552 = vmatprep.subr.mxu0 0.0
    %1553 = vmatpush1.msra.mxu0 %v1537
    %1554 = vmatprep.subr.mxu0 0.0
    %1555 = vmatpush1.msra.mxu0 0.0
    %1556 = vmatprep.subr.mxu0 0.0
    %1557 = vmatpush1.msra.mxu0 0.0
    %1558 = vmatprep.subr.mxu0 0.0
    %1559 = vmatpush1.msra.mxu0 0.0
    %1560 = vmatprep.subr.mxu0 0.0
    %1561 = vmatpush1.msra.mxu0 0.0
    %1562 = vmatprep.subr.mxu0 0.0
    %1563 = vmatpush1.msra.mxu0 0.0
    %1564 = vmatprep.subr.mxu0 0.0
    %1565 = vmatpush1.msra.mxu0 0.0
    %1566 = vmatprep.subr.mxu0 0.0
    %1567 = vmatpush1.msra.mxu0 0.0
    %1568 = vmatprep.subr.mxu0 0.0
    %1569 = vmatpush1.msra.mxu0 0.0
    %1570 = vmatprep.subr.mxu0 0.0
    %1571 = vmatpush1.msra.mxu0 0.0
    %1572 = vmatprep.subr.mxu0 0.0
    %1573 = vmatpush1.msra.mxu0 0.0
    %1574 = vmatprep.subr.mxu0 0.0
    %1575 = vmatpush1.msra.mxu0 0.0
    %1576 = vmatprep.subr.mxu0 0.0
    %1577 = vmatpush1.msra.mxu0 0.0
    %1578 = vmatprep.subr.mxu0 0.0
    %1579 = vmatpush1.msra.mxu0 0.0
    %1580 = vmatprep.subr.mxu0 0.0
    %1581 = vmatpush1.msra.mxu0 0.0
    %1582 = vmatprep.subr.mxu0 0.0
    %1583 = vmatpush1.msra.mxu0 0.0
    %1584 = vmatprep.subr.mxu0 0.0
    %1585 = vmatpush1.msra.mxu0 0.0
    %1586 = vmatprep.subr.mxu0 0.0
    %1587 = vmatpush1.msra.mxu0 0.0
    %1588 = vmatprep.subr.mxu0 0.0
    %1589 = vmatpush1.msra.mxu0 0.0
    %1590 = vmatprep.subr.mxu0 0.0
    %1591 = vmatpush1.msra.mxu0 0.0
    %1592 = vmatprep.subr.mxu0 0.0
    %1593 = vmatpush1.msra.mxu0 0.0
    %1594 = vmatprep.subr.mxu0 0.0
    %1595 = vmatpush1.msra.mxu0 0.0
    %1596 = vmatprep.subr.mxu0 0.0
    %1597 = vmatpush1.msra.mxu0 0.0
    %1598 = vmatprep.subr.mxu0 0.0
    %1599 = vmatpush1.msra.mxu0 0.0
    %1600 = vmatprep.subr.mxu0 0.0
    %1601 = vmatpush1.msra.mxu0 0.0
    %1602 = vmatprep.subr.mxu0 0.0
    %1603 = vmatpush1.msra.mxu0 0.0
    %1604 = vmatprep.subr.mxu0 0.0
    %1605 = vmatpush1.msra.mxu0 0.0
    %1606 = vmatprep.subr.mxu0 0.0
    %1607 = vmatpush1.msra.mxu0 0.0
    %1608 = vmatprep.subr.mxu0 0.0
    %1609 = vmatpush1.msra.mxu0 0.0
    %1610 = vmatprep.mubr.f32.mxu0 0.0
    %1611 = vmatmul.mubr.f32.gmra.mrb[0].mxu0 %v1542
    %v1612 = vpop.f32.mrb[0].mxu0
    %v1613 = vadd.f32 0.0, %v1612
    %v1614 = vpop.f32.mrb[0].mxu0
    %1615 = vmatprep.mubr.f32.mxu0 0.0
    %1616 = vmatmul.mubr.f32.gmra.mrb[0].mxu0 %v1544
    %v1617 = vpop.f32.mrb[0].mxu0
    %v1618 = vadd.f32 0.0, %v1617
    %v1619 = vpop.f32.mrb[0].mxu0
    %1620 = vdwg.mxu0
    %v1621 = vsel %vm55, %v1518, 0
    %v1623 = vsel %vm55, %v1519, 0
    %1625 = vmatprep.subr.mxu0 0.0
    %1626 = vmatpush1.msra.mxu0 %v50
    %1627 = vmatprep.subr.mxu0 0.0
    %1628 = vmatpush1.msra.mxu0 %v51
    %1629 = vmatprep.subr.mxu0 0.0
    %1630 = vmatpush1.msra.mxu0 %v52
    %1631 = vmatprep.subr.mxu0 0.0
    %1632 = vmatpush1.msra.mxu0 %v53
    %1633 = vmatprep.subr.mxu0 0.0
    %1634 = vmatpush1.msra.mxu0 0.0
    %1635 = vmatprep.subr.mxu0 0.0
    %1636 = vmatpush1.msra.mxu0 0.0
    %1637 = vmatprep.subr.mxu0 0.0
    %1638 = vmatpush1.msra.mxu0 0.0
    %1639 = vmatprep.subr.mxu0 0.0
    %1640 = vmatpush1.msra.mxu0 0.0
    %1641 = vmatprep.subr.mxu0 0.0
    %1642 = vmatpush1.msra.mxu0 0.0
    %1643 = vmatprep.subr.mxu0 0.0
    %1644 = vmatpush1.msra.mxu0 0.0
    %1645 = vmatprep.subr.mxu0 0.0
    %1646 = vmatpush1.msra.mxu0 0.0
    %1647 = vmatprep.subr.mxu0 0.0
    %1648 = vmatpush1.msra.mxu0 0.0
    %1649 = vmatprep.subr.mxu0 0.0
    %1650 = vmatpush1.msra.mxu0 0.0
    %1651 = vmatprep.subr.mxu0 0.0
    %1652 = vmatpush1.msra.mxu0 0.0
    %1653 = vmatprep.subr.mxu0 0.0
    %1654 = vmatpush1.msra.mxu0 0.0
    %1655 = vmatprep.subr.mxu0 0.0
    %1656 = vmatpush1.msra.mxu0 0.0
    %1657 = vmatprep.subr.mxu0 0.0
    %1658 = vmatpush1.msra.mxu0 0.0
    %1659 = vmatprep.subr.mxu0 0.0
    %1660 = vmatpush1.msra.mxu0 0.0
    %1661 = vmatprep.subr.mxu0 0.0
    %1662 = vmatpush1.msra.mxu0 0.0
    %1663 = vmatprep.subr.mxu0 0.0
    %1664 = vmatpush1.msra.mxu0 0.0
    %1665 = vmatprep.subr.mxu0 0.0
    %1666 = vmatpush1.msra.mxu0 0.0
    %1667 = vmatprep.subr.mxu0 0.0
    %1668 = vmatpush1.msra.mxu0 0.0
    %1669 = vmatprep.subr.mxu0 0.0
    %1670 = vmatpush1.msra.mxu0 0.0
    %1671 = vmatprep.subr.mxu0 0.0
    %1672 = vmatpush1.msra.mxu0 0.0
    %1673 = vmatprep.subr.mxu0 0.0
    %1674 = vmatpush1.msra.mxu0 0.0
    %1675 = vmatprep.subr.mxu0 0.0
    %1676 = vmatpush1.msra.mxu0 0.0
    %1677 = vmatprep.subr.mxu0 0.0
    %1678 = vmatpush1.msra.mxu0 0.0
    %1679 = vmatprep.subr.mxu0 0.0
    %1680 = vmatpush1.msra.mxu0 0.0
    %1681 = vmatprep.subr.mxu0 0.0
    %1682 = vmatpush1.msra.mxu0 0.0
    %1683 = vmatprep.subr.mxu0 0.0
    %1684 = vmatpush1.msra.mxu0 0.0
    %1685 = vmatprep.subr.mxu0 0.0
    %1686 = vmatpush1.msra.mxu0 0.0
    %1687 = vmatprep.subr.mxu0 0.0
    %1688 = vmatpush1.msra.mxu0 0.0
    %1689 = vmatprep.mubr.f32.mxu0 0.0
    %1690 = vmatmul.mubr.f32.gmra.mrb[0].mxu0 %v1621
    %v1691 = vpop.f32.mrb[0].mxu0
    %v1692 = vadd.f32 %v1613, %v1691
    %v1693 = vpop.f32.mrb[0].mxu0
    %1694 = vmatprep.mubr.f32.mxu0 0.0
    %1695 = vmatmul.mubr.f32.gmra.mrb[0].mxu0 %v1623
    %v1696 = vpop.f32.mrb[0].mxu0
    %v1697 = vadd.f32 %v1618, %v1696
    %v1698 = vpop.f32.mrb[0].mxu0
    %1699 = vdwg.mxu0
    %1700 = vrot.lane.b32.xlu0 %v1518, 64
    %v1701 = vpop.permute.xlu0 %1700
    %1702 = vrot.lane.b32.xlu0 %v1519, 64
    %v1703 = vpop.permute.xlu0 %1702
    %1704 = vrot.lane.b32.xlu0 %v50, 64
    %v1705 = vpop.permute.xlu0 %1704
    %1706 = vrot.lane.b32.xlu0 %v51, 64
    %v1707 = vpop.permute.xlu0 %1706
    %1708 = vrot.lane.b32.xlu0 %v52, 64
    %v1709 = vpop.permute.xlu0 %1708
    %1710 = vrot.lane.b32.xlu0 %v53, 64
    %v1711 = vpop.permute.xlu0 %1710
    %v1716 = vsel %vm55, %v1701, 0
    %v1718 = vsel %vm55, %v1703, 0
    %1720 = vmatprep.subr.mxu0 0.0
    %1721 = vmatpush1.msra.mxu0 %v1705
    %1722 = vmatprep.subr.mxu0 0.0
    %1723 = vmatpush1.msra.mxu0 %v1707
    %1724 = vmatprep.subr.mxu0 0.0
    %1725 = vmatpush1.msra.mxu0 %v1709
    %1726 = vmatprep.subr.mxu0 0.0
    %1727 = vmatpush1.msra.mxu0 %v1711
    %1728 = vmatprep.subr.mxu0 0.0
    %1729 = vmatpush1.msra.mxu0 0.0
    %1730 = vmatprep.subr.mxu0 0.0
    %1731 = vmatpush1.msra.mxu0 0.0
    %1732 = vmatprep.subr.mxu0 0.0
    %1733 = vmatpush1.msra.mxu0 0.0
    %1734 = vmatprep.subr.mxu0 0.0
    %1735 = vmatpush1.msra.mxu0 0.0
    %1736 = vmatprep.subr.mxu0 0.0
    %1737 = vmatpush1.msra.mxu0 0.0
    %1738 = vmatprep.subr.mxu0 0.0
    %1739 = vmatpush1.msra.mxu0 0.0
    %1740 = vmatprep.subr.mxu0 0.0
    %1741 = vmatpush1.msra.mxu0 0.0
    %1742 = vmatprep.subr.mxu0 0.0
    %1743 = vmatpush1.msra.mxu0 0.0
    %1744 = vmatprep.subr.mxu0 0.0
    %1745 = vmatpush1.msra.mxu0 0.0
    %1746 = vmatprep.subr.mxu0 0.0
    %1747 = vmatpush1.msra.mxu0 0.0
    %1748 = vmatprep.subr.mxu0 0.0
    %1749 = vmatpush1.msra.mxu0 0.0
    %1750 = vmatprep.subr.mxu0 0.0
    %1751 = vmatpush1.msra.mxu0 0.0
    %1752 = vmatprep.subr.mxu0 0.0
    %1753 = vmatpush1.msra.mxu0 0.0
    %1754 = vmatprep.subr.mxu0 0.0
    %1755 = vmatpush1.msra.mxu0 0.0
    %1756 = vmatprep.subr.mxu0 0.0
    %1757 = vmatpush1.msra.mxu0 0.0
    %1758 = vmatprep.subr.mxu0 0.0
    %1759 = vmatpush1.msra.mxu0 0.0
    %1760 = vmatprep.subr.mxu0 0.0
    %1761 = vmatpush1.msra.mxu0 0.0
    %1762 = vmatprep.subr.mxu0 0.0
    %1763 = vmatpush1.msra.mxu0 0.0
    %1764 = vmatprep.subr.mxu0 0.0
    %1765 = vmatpush1.msra.mxu0 0.0
    %1766 = vmatprep.subr.mxu0 0.0
    %1767 = vmatpush1.msra.mxu0 0.0
    %1768 = vmatprep.subr.mxu0 0.0
    %1769 = vmatpush1.msra.mxu0 0.0
    %1770 = vmatprep.subr.mxu0 0.0
    %1771 = vmatpush1.msra.mxu0 0.0
    %1772 = vmatprep.subr.mxu0 0.0
    %1773 = vmatpush1.msra.mxu0 0.0
    %1774 = vmatprep.subr.mxu0 0.0
    %1775 = vmatpush1.msra.mxu0 0.0
    %1776 = vmatprep.subr.mxu0 0.0
    %1777 = vmatpush1.msra.mxu0 0.0
    %1778 = vmatprep.subr.mxu0 0.0
    %1779 = vmatpush1.msra.mxu0 0.0
    %1780 = vmatprep.subr.mxu0 0.0
    %1781 = vmatpush1.msra.mxu0 0.0
    %1782 = vmatprep.subr.mxu0 0.0
    %1783 = vmatpush1.msra.mxu0 0.0
    %1784 = vmatprep.mubr.f32.mxu0 0.0
    %1785 = vmatmul.mubr.f32.gmra.mrb[0].mxu0 %v1716
    %v1786 = vpop.f32.mrb[0].mxu0
    %v1787 = vadd.f32 0.0, %v1786
    %v1788 = vpop.f32.mrb[0].mxu0
    %1789 = vmatprep.mubr.f32.mxu0 0.0
    %1790 = vmatmul.mubr.f32.gmra.mrb[0].mxu0 %v1718
    %v1791 = vpop.f32.mrb[0].mxu0
    %v1792 = vadd.f32 0.0, %v1791
    %v1793 = vpop.f32.mrb[0].mxu0
    %1794 = vdwg.mxu0
    %v1795 = vadd.f32 %v1692, %v1787
    %v1796 = vadd.f32 %v1697, %v1792
    %1797 = vrot.lane.b32.xlu0 %v1518, 32
    %v1798 = vpop.permute.xlu0 %1797
    %1799 = vrot.lane.b32.xlu0 %v1519, 32
    %v1800 = vpop.permute.xlu0 %1799
    %1801 = vrot.lane.b32.xlu0 %v50, 32
    %v1802 = vpop.permute.xlu0 %1801
    %1803 = vrot.lane.b32.xlu0 %v51, 32
    %v1804 = vpop.permute.xlu0 %1803
    %1805 = vrot.lane.b32.xlu0 %v52, 32
    %v1806 = vpop.permute.xlu0 %1805
    %1807 = vrot.lane.b32.xlu0 %v53, 32
    %v1808 = vpop.permute.xlu0 %1807
    %v1813 = vsel %vm55, %v1798, 0
    %v1815 = vsel %vm55, %v1800, 0
    %1817 = vmatprep.subr.mxu0 0.0
    %1818 = vmatpush1.msra.mxu0 %v1802
    %1819 = vmatprep.subr.mxu0 0.0
    %1820 = vmatpush1.msra.mxu0 %v1804
    %1821 = vmatprep.subr.mxu0 0.0
    %1822 = vmatpush1.msra.mxu0 %v1806
    %1823 = vmatprep.subr.mxu0 0.0
    %1824 = vmatpush1.msra.mxu0 %v1808
    %1825 = vmatprep.subr.mxu0 0.0
    %1826 = vmatpush1.msra.mxu0 0.0
    %1827 = vmatprep.subr.mxu0 0.0
    %1828 = vmatpush1.msra.mxu0 0.0
    %1829 = vmatprep.subr.mxu0 0.0
    %1830 = vmatpush1.msra.mxu0 0.0
    %1831 = vmatprep.subr.mxu0 0.0
    %1832 = vmatpush1.msra.mxu0 0.0
    %1833 = vmatprep.subr.mxu0 0.0
    %1834 = vmatpush1.msra.mxu0 0.0
    %1835 = vmatprep.subr.mxu0 0.0
    %1836 = vmatpush1.msra.mxu0 0.0
    %1837 = vmatprep.subr.mxu0 0.0
    %1838 = vmatpush1.msra.mxu0 0.0
    %1839 = vmatprep.subr.mxu0 0.0
    %1840 = vmatpush1.msra.mxu0 0.0
    %1841 = vmatprep.subr.mxu0 0.0
    %1842 = vmatpush1.msra.mxu0 0.0
    %1843 = vmatprep.subr.mxu0 0.0
    %1844 = vmatpush1.msra.mxu0 0.0
    %1845 = vmatprep.subr.mxu0 0.0
    %1846 = vmatpush1.msra.mxu0 0.0
    %1847 = vmatprep.subr.mxu0 0.0
    %1848 = vmatpush1.msra.mxu0 0.0
    %1849 = vmatprep.subr.mxu0 0.0
    %1850 = vmatpush1.msra.mxu0 0.0
    %1851 = vmatprep.subr.mxu0 0.0
    %1852 = vmatpush1.msra.mxu0 0.0
    %1853 = vmatprep.subr.mxu0 0.0
    %1854 = vmatpush1.msra.mxu0 0.0
    %1855 = vmatprep.subr.mxu0 0.0
    %1856 = vmatpush1.msra.mxu0 0.0
    %1857 = vmatprep.subr.mxu0 0.0
    %1858 = vmatpush1.msra.mxu0 0.0
    %1859 = vmatprep.subr.mxu0 0.0
    %1860 = vmatpush1.msra.mxu0 0.0
    %1861 = vmatprep.subr.mxu0 0.0
    %1862 = vmatpush1.msra.mxu0 0.0
    %1863 = vmatprep.subr.mxu0 0.0
    %1864 = vmatpush1.msra.mxu0 0.0
    %1865 = vmatprep.subr.mxu0 0.0
    %1866 = vmatpush1.msra.mxu0 0.0
    %1867 = vmatprep.subr.mxu0 0.0
    %1868 = vmatpush1.msra.mxu0 0.0
    %1869 = vmatprep.subr.mxu0 0.0
    %1870 = vmatpush1.msra.mxu0 0.0
    %1871 = vmatprep.subr.mxu0 0.0
    %1872 = vmatpush1.msra.mxu0 0.0
    %1873 = vmatprep.subr.mxu0 0.0
    %1874 = vmatpush1.msra.mxu0 0.0
    %1875 = vmatprep.subr.mxu0 0.0
    %1876 = vmatpush1.msra.mxu0 0.0
    %1877 = vmatprep.subr.mxu0 0.0
    %1878 = vmatpush1.msra.mxu0 0.0
    %1879 = vmatprep.subr.mxu0 0.0
    %1880 = vmatpush1.msra.mxu0 0.0
    %1881 = vmatprep.mubr.f32.mxu0 0.0
    %1882 = vmatmul.mubr.f32.gmra.mrb[0].mxu0 %v1813
    %v1883 = vpop.f32.mrb[0].mxu0
    %v1884 = vadd.f32 0.0, %v1883
    %v1885 = vpop.f32.mrb[0].mxu0
    %1886 = vmatprep.mubr.f32.mxu0 0.0
    %1887 = vmatmul.mubr.f32.gmra.mrb[0].mxu0 %v1815
    %v1888 = vpop.f32.mrb[0].mxu0
    %v1889 = vadd.f32 0.0, %v1888
    %v1890 = vpop.f32.mrb[0].mxu0
    %1891 = vdwg.mxu0
    %v1892 = vadd.f32 %v1795, %v1884
    %v1893 = vadd.f32 %v1796, %v1889
    %v1894 = vadd.f32 %v1379, %v1892
    %v1895 = vadd.f32 %v1380, %v1893
    %v1896 = vlaneseq
    %v1897 = vshrl.u32 %v1896, 7
    %v1898 = vsub.s32 7, %v1897
    %v1899 = vrot.slane %v54, %v1898
    %v1900 = vadd.f32 %v1894, %v1899
    %v1901 = vadd.f32 %v1895, %v1899
    %1902 = vst.msk [vmem:[#allocation7] sm:$0xff] %vm55, %v1900
    %1903 = vst.msk [vmem:[#allocation7 + $0x8] sm:$0xff] %vm55, %v1901
    // Predicated region
    $region18: #{residual_attention_block.1} parent=1 // pred_check
      _
    $region19: #{residual_attention_block.1} parent=1 // pred_check_branch
      %1905 = sbr.rel (0) target = $region21
    $region20: #{residual_attention_block.1} parent=1 // pred_region
      %s1907 = ssub.s32 256, 256
      %1908 = vsyncadd [#allocation4], %s1907
      %s1909 = sshll.u32 [#allocation7], 4
      %s1910 = int_to_ptr.vmem [resolvable:$true] %s1909
      %1915 = dma.vmem_to_hbm [thread:$0]  %s1910, 256, %s2, [#allocation4], 128, 128, 8
    $region21: #{residual_attention_block.1} parent=1 // pred_fallthru
      _
    // Predicated region
    $region22: #{residual_attention_block.1} parent=1 // pred_check
      _
    $region23: #{residual_attention_block.1} parent=1 // pred_check_branch
      %1917 = sbr.rel (0) target = $region25
    $region24: #{residual_attention_block.1} parent=1 // pred_region
      %1918 = dma.done [#allocation4], 256
    $region25: #{residual_attention_block.1} parent=1 // pred_fallthru
      _
    %1919 = vsyncpa [#allocation3], 1
    %1920 = vsyncpa [#allocation6], 1
    %1921 = vsyncpa [#allocation4], 1

</llo_original>
